<compile_context>
chip_gen: v7x
topology: tpu7x:2x2x1
jax: 0.10.0
libtpu: 0.0.40
codegen_flags: <defaults>
</compile_context>

<pallas_src>
from functools import partial

import numpy as np
import jax
import jax.numpy as jnp
from jax import lax
from jax.experimental import pallas as pl
from jax.experimental.pallas import tpu as pltpu

TILE_N = 2048        # max hit tile (rows / sublanes) per grid step
MIN_TILE_N = 512     # smallest tile used for tiny inputs
K_PAD = 128          # padded number of condensation points (cols / lanes)
BIG = 1.0e6          # sentinel: guarantees d^2 >= 1 for padded rows / lanes


def _num_tensorcores() -> int:
    """Best-effort TensorCores-per-device (2 on megacore/v7x-style parts, else 1)."""
    cores = 1
    try:
        dev = jax.devices()[0]
        for name in ("num_cores", "core_count"):
            v = getattr(dev, name, None)
            if isinstance(v, int) and v > 0:
                cores = max(cores, v)
    except Exception:
        pass
    try:
        info = pltpu.get_tpu_info()
        for name in ("num_cores", "core_count", "num_tensorcores", "tensorcore_count"):
            v = getattr(info, name, None)
            if isinstance(v, int) and v > 0:
                cores = max(cores, v)
    except Exception:
        pass
    return min(cores, 2)


def _pick_tiling(n_hits: int) -> tuple[int, int]:
    """(num_slices, tile_n): use 2 slices only when each core gets real work,
    and shrink the tile for small inputs to limit padding waste."""
    num_cores = _num_tensorcores()
    num_slices = num_cores if n_hits >= num_cores * MIN_TILE_N else 1
    tile_n = TILE_N
    while tile_n > MIN_TILE_N and n_hits <= num_slices * (tile_n // 2):
        tile_n //= 2
    return num_slices, tile_n


def _pairwise_sums(hits_p, q_p, pts_b, *, d, num_slices, steps, tile_n):
    """Per-lane partial sums, out[s, 0, k] = sum_j att*q_j*d2,
                              out[s, 1, k] = sum_j rep*q_j*(1-dist),
                              out[s, 2, k] = sum_j rep."""
    d_aug = d + 2

    def kernel(hit_ref, q_ref, pts_ref, out_ref):
        @pl.when(pl.program_id(1) == 0)
        def _init():
            out_ref[...] = jnp.zeros_like(out_ref)

        a = hit_ref[:, :d_aug]                       # (tile_n, d+2) augmented coords
        mj = hit_ref[:, d_aug:d_aug + 1]             # (tile_n, 1) match lane (or -1)
        lhs = q_ref[...]                             # (8, tile_n): row0=q_j, row1=valid

        # squared distance via one MXU matmul (norms pre-baked in the wrapper)
        d2 = jnp.dot(a, pts_ref[...], preferred_element_type=jnp.float32)
        d2 = jnp.maximum(d2, 0.0)                    # (tile_n, K_PAD)

        lane = lax.broadcasted_iota(jnp.int32, (1, K_PAD), 1).astype(jnp.float32)
        att = mj == lane                             # attractive pairs
        rep = jnp.logical_not(att) & (d2 < 1.0)      # repulsive pairs (mask from d2)
        dist = jnp.sqrt(d2)                          # only needed for the rep weight

        att_val = jnp.where(att, d2, 0.0)
        rep_val = jnp.where(rep, 1.0 - dist, 0.0)
        rep_cnt = rep.astype(jnp.float32)

        # per-lane reductions over hits offloaded to the (otherwise idle) MXU
        p_att = jnp.dot(lhs, att_val, preferred_element_type=jnp.float32)  # row 0
        p_rep = jnp.dot(lhs, rep_val, preferred_element_type=jnp.float32)  # row 0
        p_cnt = jnp.dot(lhs, rep_cnt, preferred_element_type=jnp.float32)  # row 1

        out_ref[0:1, :] += p_att[0:1, :]
        out_ref[1:2, :] += p_rep[0:1, :]
        out_ref[2:3, :] += p_cnt[1:2, :]

    return pl.pallas_call(
        kernel,
        out_shape=jax.ShapeDtypeStruct((num_slices, 3, K_PAD), jnp.float32),
        grid_spec=pltpu.PrefetchScalarGridSpec(
            num_scalar_prefetch=0,
            grid=(num_slices, steps),
            in_specs=[
                pl.BlockSpec((tile_n, d + 3), lambda s, i: (s * steps + i, 0)),
                pl.BlockSpec((None, 8, tile_n), lambda s, i: (s * steps + i, 0, 0)),
                pl.BlockSpec((d_aug, K_PAD), lambda s, i: (0, 0)),
            ],
            out_specs=pl.BlockSpec((None, 3, K_PAD), lambda s, i: (s, 0, 0)),
        ),
        compiler_params=pltpu.CompilerParams(
            dimension_semantics=("parallel", "arbitrary"),
            vmem_limit_bytes=48 * 1024 * 1024),
    )(hits_p, q_p, pts_b)


@partial(jax.jit, static_argnames=("q_min", "noise_threshold", "num_slices", "tile_n"))
def _forward_device(beta, x, cluster_ids, oids, *, q_min, noise_threshold,
                    num_slices, tile_n):
    n_hits, d = x.shape
    n_k = oids.shape[0]
    beta = beta.astype(jnp.float32)
    x = x.astype(jnp.float32)

    q_j = jnp.arctanh(beta) ** 2 + q_min                          # (N,)
    att_mask_jk = cluster_ids[:, None] == oids[None, :]           # (N, K) exact int compare
    alphas_k = jnp.argmax(q_j[:, None] * att_mask_jk, axis=0)     # (K,)
    m_j = jnp.where(jnp.any(att_mask_jk, axis=1),
                    jnp.argmax(att_mask_jk, axis=1), -1).astype(jnp.float32)
    x_k = x[alphas_k]                                             # (K, D)
    q_k = q_j[alphas_k]                                           # (K,)
    beta_k = beta[alphas_k]

    xj_n2 = jnp.sum(x * x, axis=1, keepdims=True)                 # (N, 1)
    xk_n2 = jnp.sum(x_k * x_k, axis=1)                            # (K,)

    chunk = num_slices * tile_n
    n_pad = -(-n_hits // chunk) * chunk
    steps = n_pad // chunk
    n_tiles = num_slices * steps
    pad_n = n_pad - n_hits

    # Packed hits stream [x, ||x||^2, 1, match-lane]: one concatenate of
    # pad-wrapped columns (single fused producer, no extra whole-array pad pass).
    hits_p = jnp.concatenate([
        jnp.pad(x, ((0, pad_n), (0, 0))),
        jnp.pad(xj_n2, ((0, pad_n), (0, 0)), constant_values=BIG),   # d2 >= BIG
        jnp.pad(jnp.ones((n_hits, 1), jnp.float32), ((0, pad_n), (0, 0)),
                constant_values=1.0),
        jnp.pad(m_j[:, None], ((0, pad_n), (0, 0)), constant_values=-1.0),
    ], axis=1)                                                    # (n_pad, d+3)

    # Lane-dense per-hit scalars = MXU reduction LHS: row0 = q_j (0 beyond N),
    # row1 = validity indicator (used for the unweighted repulsive-pair count).
    q_p = jnp.zeros((n_tiles, 8, tile_n), jnp.float32)
    q_p = q_p.at[:, 0, :].set(jnp.pad(q_j, (0, pad_n)).reshape(n_tiles, tile_n))
    q_p = q_p.at[:, 1, :].set(
        jnp.pad(jnp.ones((n_hits,), jnp.float32), (0, pad_n)).reshape(n_tiles, tile_n))

    # Augmented point matrix B so that [x_j,||x_j||^2,1] @ B == ||x_j - x_k||^2.
    pts_b = jnp.zeros((d + 2, K_PAD), jnp.float32)
    pts_b = pts_b.at[:d, :n_k].set(-2.0 * x_k.T)
    pts_b = pts_b.at[d, :].set(1.0)
    pts_b = pts_b.at[d + 1, :].set(BIG)               # padded lanes: d2 >= BIG
    pts_b = pts_b.at[d + 1, :n_k].set(xk_n2)
    qk_pad = jnp.zeros((K_PAD,), jnp.float32).at[:n_k].set(q_k)

    parts = _pairwise_sums(hits_p, q_p, pts_b, d=d, num_slices=num_slices,
                           steps=steps, tile_n=tile_n)
    tot = jnp.sum(parts, axis=0)                      # (3, K_PAD) per-lane partials
    sum_att = jnp.sum(tot[0] * qk_pad)
    sum_rep = jnp.sum(tot[1] * qk_pad)
    n_rep = jnp.sum(tot[2])

    l_coward = jnp.mean(1.0 - beta_k)
    noise_mask = cluster_ids <= noise_threshold
    # guarded mean (reference NaNs when there are no noise hits)
    l_noise = (jnp.sum(jnp.where(noise_mask, beta, 0.0))
               / jnp.maximum(jnp.sum(noise_mask.astype(jnp.float32)), 1.0))
    return sum_att, sum_rep, n_rep, l_coward, l_noise


def condensation_loss_tiger_pallas(*, beta, x, cluster_ids, reconstructable, pt, eta,
                                   q_min=0.01, pt_thld=0.9, max_eta=4.0,
                                   noise_threshold=0, max_n_rep=0):
    eps = 1e-9
    n_hits, d = x.shape

    # ---- host-side glue (mirrors cluster_ids.cpu().numpy() + np.unique) ----
    cid_np = np.asarray(cluster_ids)
    oi_hit = ((np.asarray(pt) > pt_thld)
              & (np.asarray(reconstructable) > 0)
              & (np.abs(np.asarray(eta)) < max_eta)
              & (cid_np > noise_threshold))
    oids_np = np.unique(cid_np[oi_hit])
    n_k = len(oids_np)
    assert 0 < n_k <= K_PAD, "No particles of interest found, cannot evaluate loss"
    n_hits_oi = int(oi_hit.sum())

    num_slices, tile_n = _pick_tiling(n_hits)
    sum_att, sum_rep, n_rep, l_coward, l_noise = _forward_device(
        jnp.asarray(beta), jnp.asarray(x), jnp.asarray(cluster_ids),
        jnp.asarray(oids_np),
        q_min=float(q_min), noise_threshold=int(noise_threshold),
        num_slices=num_slices, tile_n=tile_n)

    norm_att = eps + n_hits_oi - n_k
    norm_rep = eps + (n_k - 1) * n_hits
    v_att = sum_att / norm_att
    v_rep = sum_rep / norm_rep

    loss_dct = {"attractive": v_att, "repulsive": v_rep,
                "coward": l_coward, "noise": l_noise}
    extra_dct = {"n_rep": n_rep}
    return loss_dct, extra_dct


class CondensationLossTigerPallas:
    """JAX/Pallas port of CondensationLossTiger (forward pass only)."""

    def __init__(self, *, lw_repulsive=1.0, lw_noise=0.0, lw_coward=0.0,
                 q_min=0.01, pt_thld=0.9, max_eta=4.0, max_n_rep=0, sample_pids=1.0):
        self.lw_repulsive = lw_repulsive
        self.lw_noise = lw_noise
        self.lw_coward = lw_coward
        self.q_min = q_min
        self.pt_thld = pt_thld
        self.max_eta = max_eta
        self.max_n_rep = max_n_rep
        self.sample_pids = sample_pids

    def __call__(self, *, beta, x, cluster_ids, reconstructable, pt, eta,
                 ec_hit_mask=None, **kwargs):
        if ec_hit_mask is not None:
            cluster_ids = cluster_ids[ec_hit_mask]
            reconstructable = reconstructable[ec_hit_mask]
            pt = pt[ec_hit_mask]
            eta = eta[ec_hit_mask]
        losses, extra = condensation_loss_tiger_pallas(
            beta=beta, x=x, cluster_ids=cluster_ids, reconstructable=reconstructable,
            pt=pt, eta=eta, q_min=self.q_min, pt_thld=self.pt_thld,
            max_eta=self.max_eta, noise_threshold=0, max_n_rep=self.max_n_rep)
        weights = {"attractive": 1.0, "repulsive": self.lw_repulsive,
                   "noise": self.lw_noise, "coward": self.lw_coward}
        total = sum(losses[k] * weights[k] for k in losses)
        return losses, weights, extra, total


def _reference_loss(beta, x, cluster_ids, reconstructable, pt, eta,
                    q_min=0.01, pt_thld=0.9, max_eta=4.0, noise_threshold=0):
    """Pure-numpy reference of the same forward semantics."""
    eps = 1e-9
    cid = np.asarray(cluster_ids)
    beta = np.asarray(beta, np.float32)
    x = np.asarray(x, np.float32)
    oi = ((np.asarray(pt) > pt_thld) & (np.asarray(reconstructable) > 0)
          & (np.abs(np.asarray(eta)) < max_eta) & (cid > noise_threshold))
    oids = np.unique(cid[oi])
    q = np.arctanh(beta) ** 2 + q_min
    att = cid[:, None] == oids[None, :]
    alphas = np.argmax(q[:, None] * att, axis=0)
    x_k = x[alphas]
    q_k = q[alphas]
    dist = np.sqrt(((x[:, None, :] - x_k[None, :, :]) ** 2).sum(-1))
    qw = q[:, None] * q_k[None, :]
    rep = (~att) & (dist < 1.0)
    n_hits = len(beta)
    norm_att = eps + oi.sum() - len(oids)
    norm_rep = eps + (len(oids) - 1) * n_hits
    v_att = (qw[att] * dist[att] ** 2).sum() / norm_att
    v_rep = (qw[rep] * (1.0 - dist[rep])).sum() / norm_rep
    l_coward = np.mean(1.0 - beta[alphas])
    l_noise = np.mean(beta[cid <= noise_threshold])
    return ({"attractive": v_att, "repulsive": v_rep,
             "coward": l_coward, "noise": l_noise}, int(rep.sum()))


if __name__ == "__main__":
    key = jax.random.PRNGKey(0)
    ks = jax.random.split(key, 8)
    N, D, P = 256, 8, 8   # hits, cluster-space dim, particle labels (0 == noise)

    cluster_ids = jax.random.randint(ks[0], (N,), 0, P, dtype=jnp.int32)
    cluster_ids = cluster_ids.at[0].set(0).at[1].set(1)  # guarantee noise + cluster 1
    beta = jax.random.uniform(ks[1], (N,), minval=0.05, maxval=0.9)
    x = jax.random.normal(ks[2], (N, D), dtype=jnp.float32)

    # per-particle attributes mapped onto hits
    pt_part = jax.random.uniform(ks[3], (P,), minval=0.1, maxval=2.0)
    pt_part = pt_part.at[0].set(0.0).at[1].set(1.5)
    recon_part = (jax.random.uniform(ks[4], (P,)) > 0.3).astype(jnp.float32)
    recon_part = recon_part.at[0].set(0.0).at[1].set(1.0)
    eta_part = jax.random.uniform(ks[5], (P,), minval=-5.0, maxval=5.0)
    eta_part = eta_part.at[1].set(0.0)
    pt = pt_part[cluster_ids]
    reconstructable = recon_part[cluster_ids]
    eta = eta_part[cluster_ids]

    loss_fn = CondensationLossTigerPallas()
    losses, weights, extra, total = loss_fn(
        beta=beta, x=x, cluster_ids=cluster_ids,
        reconstructable=reconstructable, pt=pt, eta=eta, ec_hit_mask=None)
    jax.block_until_ready(total)

    ref_losses, ref_nrep = _reference_loss(beta, x, cluster_ids,
                                           reconstructable, pt, eta)
    for k in ref_losses:
        np.testing.assert_allclose(np.asarray(losses[k]), ref_losses[k],
                                   rtol=2e-3, atol=1e-4)
    assert abs(int(round(float(extra["n_rep"]))) - ref_nrep) <= 2

    print("KERNEL_OK")
</pallas_src>

<mosaic_0001>
module attributes {stable_mosaic.version = 11 : i64} {
  func.func @kernel(%arg0: i32, %arg1: i32, %arg2: memref<512x11xf32, #tpu.memory_space<vmem>>, %arg3: memref<1x8x512xf32, #tpu.memory_space<vmem>>, %arg4: memref<10x128xf32, #tpu.memory_space<vmem>>, %arg5: memref<1x3x128xf32, #tpu.memory_space<vmem>>) attributes {dimension_semantics = [#tpu.dimension_semantics<parallel>, #tpu.dimension_semantics<arbitrary>], iteration_bounds = array<i64: 1, 1>, scalar_prefetch = 0 : i64, scratch_operands = 0 : i64, tpu.core_type = #tpu.core_type<tc>, window_params = [{transform_indices = @transform_0, window_bounds = array<i64: 512, 11>}, {transform_indices = @transform_1, window_bounds = array<i64: 1, 8, 512>}, {pipeline_mode = #tpu.pipeline_mode<synchronous>, transform_indices = @transform_2, window_bounds = array<i64: 10, 128>}, {transform_indices = @transform_3, window_bounds = array<i64: 1, 3, 128>}]} {
    %c0_i32 = arith.constant 0 : i32
    %0 = arith.cmpi eq, %arg1, %c0_i32 : i32
    %1 = arith.extui %0 : i1 to i32
    %c0_i32_0 = arith.constant 0 : i32
    %2 = arith.cmpi ne, %1, %c0_i32_0 : i32
    scf.if %2 {
      %cst_33 = arith.constant 0.000000e+00 : f32
      %53 = vector.broadcast %cst_33 : f32 to vector<3x128xf32>
      %c0_34 = arith.constant 0 : index
      %c0_35 = arith.constant 0 : index
      %c0_36 = arith.constant 0 : index
      %54 = vector.load %arg5[%c0_34, %c0_35, %c0_36] : memref<1x3x128xf32, #tpu.memory_space<vmem>>, vector<1x3x128xf32>
      %55 = vector.shape_cast %54 : vector<1x3x128xf32> to vector<3x128xf32>
      %56 = vector.shape_cast %53 : vector<3x128xf32> to vector<1x3x128xf32>
      tpu.vector_store %arg5[%c0_34, %c0_35, %c0_36], %56 {strides = array<i32>} : memref<1x3x128xf32, #tpu.memory_space<vmem>>, vector<1x3x128xf32>,
    } else {
    }
    %c0 = arith.constant 0 : index
    %c0_1 = arith.constant 0 : index
    %3 = vector.load %arg2[%c0, %c0_1] : memref<512x11xf32, #tpu.memory_space<vmem>>, vector<512x10xf32>
    %c0_2 = arith.constant 0 : index
    %c10 = arith.constant 10 : index
    %4 = vector.load %arg2[%c0_2, %c10] : memref<512x11xf32, #tpu.memory_space<vmem>>, vector<512x1xf32>
    %c0_3 = arith.constant 0 : index
    %c0_4 = arith.constant 0 : index
    %c0_5 = arith.constant 0 : index
    %5 = vector.load %arg3[%c0_3, %c0_4, %c0_5] : memref<1x8x512xf32, #tpu.memory_space<vmem>>, vector<1x8x512xf32>
    %6 = vector.shape_cast %5 : vector<1x8x512xf32> to vector<8x512xf32>
    %c0_6 = arith.constant 0 : index
    %c0_7 = arith.constant 0 : index
    %7 = vector.load %arg4[%c0_6, %c0_7] : memref<10x128xf32, #tpu.memory_space<vmem>>, vector<10x128xf32>
    %cst = arith.constant dense<0.000000e+00> : vector<512x128xf32>
    %8 = tpu.matmul %3, %7, %cst {dimension_numbers = #tpu.dot_dimension_numbers<[1], [0], [0], [1], [0, 0, 1, 1], [], []>} : vector<512x10xf32>, vector<10x128xf32>, vector<512x128xf32> -> vector<512x128xf32>
    %cst_8 = arith.constant 0.000000e+00 : f32
    %9 = vector.broadcast %cst_8 : f32 to vector<512x128xf32>
    %10 = arith.maximumf %8, %9 : vector<512x128xf32>
    %11 = tpu.iota {dimensions = array<i32: 1>} : vector<1x128xi32>
    %12 = arith.sitofp %11 : vector<1x128xi32> to vector<1x128xf32>
    %13 = vector.broadcast %4 : vector<512x1xf32> to vector<512x128xf32>
    %14 = vector.broadcast %12 : vector<1x128xf32> to vector<512x128xf32>
    %15 = arith.cmpf oeq, %13, %14 : vector<512x128xf32>
    %cst_9 = arith.constant dense<true> : vector<512x128xi1>
    %16 = arith.xori %15, %cst_9 : vector<512x128xi1>
    %cst_10 = arith.constant 1.000000e+00 : f32
    %17 = vector.broadcast %cst_10 : f32 to vector<512x128xf32>
    %18 = arith.cmpf olt, %10, %17 : vector<512x128xf32>
    %19 = arith.andi %16, %18 : vector<512x128xi1>
    %20 = math.sqrt %10 : vector<512x128xf32>
    %cst_11 = arith.constant 0.000000e+00 : f32
    %21 = vector.broadcast %cst_11 : f32 to vector<512x128xf32>
    %22 = arith.select %15, %10, %21 : vector<512x128xi1>, vector<512x128xf32>
    %cst_12 = arith.constant 1.000000e+00 : f32
    %23 = vector.broadcast %cst_12 : f32 to vector<512x128xf32>
    %24 = arith.subf %23, %20 : vector<512x128xf32>
    %cst_13 = arith.constant 0.000000e+00 : f32
    %25 = vector.broadcast %cst_13 : f32 to vector<512x128xf32>
    %26 = arith.select %19, %24, %25 : vector<512x128xi1>, vector<512x128xf32>
    %27 = arith.extui %19 : vector<512x128xi1> to vector<512x128xi32>
    %28 = arith.sitofp %27 : vector<512x128xi32> to vector<512x128xf32>
    %cst_14 = arith.constant dense<0.000000e+00> : vector<8x128xf32>
    %29 = tpu.matmul %6, %22, %cst_14 {dimension_numbers = #tpu.dot_dimension_numbers<[1], [0], [0], [1], [0, 0, 1, 1], [], []>} : vector<8x512xf32>, vector<512x128xf32>, vector<8x128xf32> -> vector<8x128xf32>
    %cst_15 = arith.constant dense<0.000000e+00> : vector<8x128xf32>
    %30 = tpu.matmul %6, %26, %cst_15 {dimension_numbers = #tpu.dot_dimension_numbers<[1], [0], [0], [1], [0, 0, 1, 1], [], []>} : vector<8x512xf32>, vector<512x128xf32>, vector<8x128xf32> -> vector<8x128xf32>
    %cst_16 = arith.constant dense<0.000000e+00> : vector<8x128xf32>
    %31 = tpu.matmul %6, %28, %cst_16 {dimension_numbers = #tpu.dot_dimension_numbers<[1], [0], [0], [1], [0, 0, 1, 1], [], []>} : vector<8x512xf32>, vector<512x128xf32>, vector<8x128xf32> -> vector<8x128xf32>
    %c0_17 = arith.constant 0 : index
    %c0_18 = arith.constant 0 : index
    %c0_19 = arith.constant 0 : index
    %32 = vector.load %arg5[%c0_17, %c0_18, %c0_19] : memref<1x3x128xf32, #tpu.memory_space<vmem>>, vector<1x1x128xf32>
    %33 = vector.shape_cast %32 : vector<1x1x128xf32> to vector<1x128xf32>
    %34 = vector.extract_strided_slice %29 {offsets = [0, 0], sizes = [1, 128], strides = [1, 1]} : vector<8x128xf32> to vector<1x128xf32>
    %35 = arith.addf %33, %34 : vector<1x128xf32>
    %c0_20 = arith.constant 0 : index
    %c0_21 = arith.constant 0 : index
    %c0_22 = arith.constant 0 : index
    %36 = vector.load %arg5[%c0_20, %c0_21, %c0_22] : memref<1x3x128xf32, #tpu.memory_space<vmem>>, vector<1x1x128xf32>
    %37 = vector.shape_cast %36 : vector<1x1x128xf32> to vector<1x128xf32>
    %38 = vector.shape_cast %35 : vector<1x128xf32> to vector<1x1x128xf32>
    tpu.vector_store %arg5[%c0_20, %c0_21, %c0_22], %38 {strides = array<i32>} : memref<1x3x128xf32, #tpu.memory_space<vmem>>, vector<1x1x128xf32>,
    %c0_23 = arith.constant 0 : index
    %c1 = arith.constant 1 : index
    %c0_24 = arith.constant 0 : index
    %39 = vector.load %arg5[%c0_23, %c1, %c0_24] : memref<1x3x128xf32, #tpu.memory_space<vmem>>, vector<1x1x128xf32>
    %40 = vector.shape_cast %39 : vector<1x1x128xf32> to vector<1x128xf32>
    %41 = vector.extract_strided_slice %30 {offsets = [0, 0], sizes = [1, 128], strides = [1, 1]} : vector<8x128xf32> to vector<1x128xf32>
    %42 = arith.addf %40, %41 : vector<1x128xf32>
    %c0_25 = arith.constant 0 : index
    %c1_26 = arith.constant 1 : index
    %c0_27 = arith.constant 0 : index
    %43 = vector.load %arg5[%c0_25, %c1_26, %c0_27] : memref<1x3x128xf32, #tpu.memory_space<vmem>>, vector<1x1x128xf32>
    %44 = vector.shape_cast %43 : vector<1x1x128xf32> to vector<1x128xf32>
    %45 = vector.shape_cast %42 : vector<1x128xf32> to vector<1x1x128xf32>
    tpu.vector_store %arg5[%c0_25, %c1_26, %c0_27], %45 {strides = array<i32>} : memref<1x3x128xf32, #tpu.memory_space<vmem>>, vector<1x1x128xf32>,
    %c0_28 = arith.constant 0 : index
    %c2 = arith.constant 2 : index
    %c0_29 = arith.constant 0 : index
    %46 = vector.load %arg5[%c0_28, %c2, %c0_29] : memref<1x3x128xf32, #tpu.memory_space<vmem>>, vector<1x1x128xf32>
    %47 = vector.shape_cast %46 : vector<1x1x128xf32> to vector<1x128xf32>
    %48 = vector.extract_strided_slice %31 {offsets = [1, 0], sizes = [1, 128], strides = [1, 1]} : vector<8x128xf32> to vector<1x128xf32>
    %49 = arith.addf %47, %48 : vector<1x128xf32>
    %c0_30 = arith.constant 0 : index
    %c2_31 = arith.constant 2 : index
    %c0_32 = arith.constant 0 : index
    %50 = vector.load %arg5[%c0_30, %c2_31, %c0_32] : memref<1x3x128xf32, #tpu.memory_space<vmem>>, vector<1x1x128xf32>
    %51 = vector.shape_cast %50 : vector<1x1x128xf32> to vector<1x128xf32>
    %52 = vector.shape_cast %49 : vector<1x128xf32> to vector<1x1x128xf32>
    tpu.vector_store %arg5[%c0_30, %c2_31, %c0_32], %52 {strides = array<i32>} : memref<1x3x128xf32, #tpu.memory_space<vmem>>, vector<1x1x128xf32>,
    return
  }
  func.func @transform_0(%arg0: i32, %arg1: i32) -> (i32, i32) {
    %c1_i32 = arith.constant 1 : i32
    %0 = arith.muli %arg0, %c1_i32 : i32
    %1 = arith.addi %0, %arg1 : i32
    %c0_i32 = arith.constant 0 : i32
    %c0_i32_0 = arith.constant 0 : i32
    return %1, %c0_i32 : i32, i32
  }
  func.func @transform_1(%arg0: i32, %arg1: i32) -> (i32, i32, i32) {
    %c1_i32 = arith.constant 1 : i32
    %0 = arith.muli %arg0, %c1_i32 : i32
    %1 = arith.addi %0, %arg1 : i32
    %c0_i32 = arith.constant 0 : i32
    %c0_i32_0 = arith.constant 0 : i32
    %c0_i32_1 = arith.constant 0 : i32
    return %1, %c0_i32, %c0_i32_0 : i32, i32, i32
  }
  func.func @transform_2(%arg0: i32, %arg1: i32) -> (i32, i32) {
    %c0_i32 = arith.constant 0 : i32
    %c0_i32_0 = arith.constant 0 : i32
    %c0_i32_1 = arith.constant 0 : i32
    return %c0_i32, %c0_i32_0 : i32, i32
  }
  func.func @transform_3(%arg0: i32, %arg1: i32) -> (i32, i32, i32) {
    %c0_i32 = arith.constant 0 : i32
    %c0_i32_0 = arith.constant 0 : i32
    %c0_i32_1 = arith.constant 0 : i32
    return %arg0, %c0_i32, %c0_i32_0 : i32, i32, i32
  }
}

</mosaic_0001>

<llo_original>
// kernel: _forward_device.1
$region0: #{_forward_device.1}
  #allocation0 [shape = 'u32[]', space=smem, size = 0x4, offset = 0x4, fixed_abs, tag = 'smem constant byte address 0x4 - core index']
  #allocation1 [shape = 'u32[144,128]{1,0:T(1,128)}', space=vmem, size = 0x12000, scoped, tag = 'internal scratch']
  %s0 = inlined_call_operand.vmem [shape: f32[512,11], index: 0, kind: input, shape index: {}]
  %s1 = inlined_call_operand.vmem [shape: f32[1,8,512], index: 1, kind: input, shape index: {}]
  %s2 = inlined_call_operand.vmem [shape: f32[10,128], index: 2, kind: input, shape index: {}]
  %s3 = inlined_call_operand.vmem [shape: f32[1,3,128], index: 3, kind: output, shape index: {}]
  %s4 = sld [smem:[#allocation0]]
  $region26: #{_forward_device.1} parent=0
    _
  %s6 = ssub.s32 1, %s4
  %s7 = scalar_select 0, %s6, %s4
  // Predicated region
  $region2: #{_forward_device.1} parent=0 // pred_check
    _
  $region3: #{_forward_device.1} parent=0 // pred_check_branch
    %9 = sbr.rel (0) target = $region5
  $region4: #{_forward_device.1} parent=0 // pred_region
    %s10 = sadd.s32 0, 0
    %s11 = smul.u32 64, %s10
    %p12 = scmp.lt.s32.totalorder %s11, 63
    %s13 = scalar_select %p12, %s11, 63
    %s14 = smul.addr %s13, 8
    %s15 = scalar_lea.vmem %s0, %s14
    %s16 = sadd.s32 0, 0
    %s17 = smul.u32 64, %s16
  $region5: #{_forward_device.1} parent=0 // pred_fallthru
    _
  // Predicated region
  $region6: #{_forward_device.1} parent=0 // pred_check
    _
  $region7: #{_forward_device.1} parent=0 // pred_check_branch
    %19 = sbr.rel (0) target = $region9
  $region8: #{_forward_device.1} parent=0 // pred_region
    %s20 = sadd.s32 0, 0
    %p21 = scmp.lt.s32.totalorder %s20, 0
    %s22 = scalar_select %p21, %s20, 0
    %s23 = smul.addr %s22, 4
    %s24 = smul.addr %s23, 8
    %s25 = scalar_lea.vmem %s1, %s24
    %s26 = sadd.s32 0, 0
  $region9: #{_forward_device.1} parent=0 // pred_fallthru
    _
  // Predicated region
  $region10: #{_forward_device.1} parent=0 // pred_check
    _
  $region11: #{_forward_device.1} parent=0 // pred_check_branch
    %28 = sbr.rel (0) target = $region13
  $region12: #{_forward_device.1} parent=0 // pred_region
    _
  $region13: #{_forward_device.1} parent=0 // pred_fallthru
    _
  %s29 = sadd.s32 0, 0
  %s30 = smul.u32 64, %s29
  %p31 = scmp.lt.s32.totalorder %s30, 63
  %s32 = scalar_select %p31, %s30, 63
  %s33 = smul.addr %s32, 8
  %s34 = scalar_lea.vmem %s0, %s33
  %s35 = sadd.s32 0, 0
  %p36 = scmp.lt.s32.totalorder %s35, 0
  %s37 = scalar_select %p36, %s35, 0
  %s38 = smul.addr %s37, 4
  %s39 = smul.addr %s38, 8
  %s40 = scalar_lea.vmem %s1, %s39
  %s41 = sadd.s32 0, 0
  %s42 = smul.u32 64, %s41
  %p43 = scmp.lt.s32.totalorder %s42, 63
  %s44 = scalar_select %p43, %s42, 63
  %s45 = smul.addr %s44, 8
  %s46 = scalar_lea.vmem %s0, %s45
  %s47 = sadd.s32 0, 0
  %s48 = smul.u32 64, %s47
  %s49 = sadd.s32 0, 0
  %p50 = scmp.lt.s32.totalorder %s49, 0
  %s51 = scalar_select %p50, %s49, 0
  %s52 = smul.addr %s51, 4
  %s53 = smul.addr %s52, 8
  %s54 = scalar_lea.vmem %s1, %s53
  %s55 = sadd.s32 0, 0
  %p56 = scmp.eq.s32.totalorder 0, 0
  // Predicated region
  $region14: #{_forward_device.1} parent=0 // pred_check
    %p57 = pneg %p56
  $region15: #{_forward_device.1} parent=0 // pred_check_branch
    %59 = sbr.rel (%p57) target = $region17
  $region16: #{_forward_device.1} parent=0 // pred_region
    %60 = vst [vmem:[%s3] sm:$0x7] 0.0
  $region17: #{_forward_device.1} parent=0 // pred_fallthru
    _
  %v61 = vld [vmem:[%s46] sm:$0xff]
  %v62 = vld [vmem:[%s46 + $0x8] sm:$0xff]
  %v63 = vld [vmem:[%s46 + $0x10] sm:$0xff]
  %v64 = vld [vmem:[%s46 + $0x18] sm:$0xff]
  %v65 = vld [vmem:[%s46 + $0x20] sm:$0xff]
  %v66 = vld [vmem:[%s46 + $0x28] sm:$0xff]
  %v67 = vld [vmem:[%s46 + $0x30] sm:$0xff]
  %v68 = vld [vmem:[%s46 + $0x38] sm:$0xff]
  %v69 = vld [vmem:[%s46 + $0x40] sm:$0xff]
  %v70 = vld [vmem:[%s46 + $0x48] sm:$0xff]
  %v71 = vld [vmem:[%s46 + $0x50] sm:$0xff]
  %v72 = vld [vmem:[%s46 + $0x58] sm:$0xff]
  %v73 = vld [vmem:[%s46 + $0x60] sm:$0xff]
  %v74 = vld [vmem:[%s46 + $0x68] sm:$0xff]
  %v75 = vld [vmem:[%s46 + $0x70] sm:$0xff]
  %v76 = vld [vmem:[%s46 + $0x78] sm:$0xff]
  %v77 = vld [vmem:[%s46 + $0x80] sm:$0xff]
  %v78 = vld [vmem:[%s46 + $0x88] sm:$0xff]
  %v79 = vld [vmem:[%s46 + $0x90] sm:$0xff]
  %v80 = vld [vmem:[%s46 + $0x98] sm:$0xff]
  %v81 = vld [vmem:[%s46 + $0xa0] sm:$0xff]
  %v82 = vld [vmem:[%s46 + $0xa8] sm:$0xff]
  %v83 = vld [vmem:[%s46 + $0xb0] sm:$0xff]
  %v84 = vld [vmem:[%s46 + $0xb8] sm:$0xff]
  %v85 = vld [vmem:[%s46 + $0xc0] sm:$0xff]
  %v86 = vld [vmem:[%s46 + $0xc8] sm:$0xff]
  %v87 = vld [vmem:[%s46 + $0xd0] sm:$0xff]
  %v88 = vld [vmem:[%s46 + $0xd8] sm:$0xff]
  %v89 = vld [vmem:[%s46 + $0xe0] sm:$0xff]
  %v90 = vld [vmem:[%s46 + $0xe8] sm:$0xff]
  %v91 = vld [vmem:[%s46 + $0xf0] sm:$0xff]
  %v92 = vld [vmem:[%s46 + $0xf8] sm:$0xff]
  %v93 = vld [vmem:[%s46 + $0x100] sm:$0xff]
  %v94 = vld [vmem:[%s46 + $0x108] sm:$0xff]
  %v95 = vld [vmem:[%s46 + $0x110] sm:$0xff]
  %v96 = vld [vmem:[%s46 + $0x118] sm:$0xff]
  %v97 = vld [vmem:[%s46 + $0x120] sm:$0xff]
  %v98 = vld [vmem:[%s46 + $0x128] sm:$0xff]
  %v99 = vld [vmem:[%s46 + $0x130] sm:$0xff]
  %v100 = vld [vmem:[%s46 + $0x138] sm:$0xff]
  %v101 = vld [vmem:[%s46 + $0x140] sm:$0xff]
  %v102 = vld [vmem:[%s46 + $0x148] sm:$0xff]
  %v103 = vld [vmem:[%s46 + $0x150] sm:$0xff]
  %v104 = vld [vmem:[%s46 + $0x158] sm:$0xff]
  %v105 = vld [vmem:[%s46 + $0x160] sm:$0xff]
  %v106 = vld [vmem:[%s46 + $0x168] sm:$0xff]
  %v107 = vld [vmem:[%s46 + $0x170] sm:$0xff]
  %v108 = vld [vmem:[%s46 + $0x178] sm:$0xff]
  %v109 = vld [vmem:[%s46 + $0x180] sm:$0xff]
  %v110 = vld [vmem:[%s46 + $0x188] sm:$0xff]
  %v111 = vld [vmem:[%s46 + $0x190] sm:$0xff]
  %v112 = vld [vmem:[%s46 + $0x198] sm:$0xff]
  %v113 = vld [vmem:[%s46 + $0x1a0] sm:$0xff]
  %v114 = vld [vmem:[%s46 + $0x1a8] sm:$0xff]
  %v115 = vld [vmem:[%s46 + $0x1b0] sm:$0xff]
  %v116 = vld [vmem:[%s46 + $0x1b8] sm:$0xff]
  %v117 = vld [vmem:[%s46 + $0x1c0] sm:$0xff]
  %v118 = vld [vmem:[%s46 + $0x1c8] sm:$0xff]
  %v119 = vld [vmem:[%s46 + $0x1d0] sm:$0xff]
  %v120 = vld [vmem:[%s46 + $0x1d8] sm:$0xff]
  %v121 = vld [vmem:[%s46 + $0x1e0] sm:$0xff]
  %v122 = vld [vmem:[%s46 + $0x1e8] sm:$0xff]
  %v123 = vld [vmem:[%s46 + $0x1f0] sm:$0xff]
  %v124 = vld [vmem:[%s46 + $0x1f8] sm:$0xff]
  %v125 = vld [vmem:[%s54] sm:$0xff]
  %v126 = vld [vmem:[%s54 + $0x8] sm:$0xff]
  %v127 = vld [vmem:[%s54 + $0x10] sm:$0xff]
  %v128 = vld [vmem:[%s54 + $0x18] sm:$0xff]
  %v129 = vld [vmem:[%s2] sm:$0xff]
  %v130 = vld [vmem:[%s2 + $0x8] sm:$0x3]
  %vm131 = vcmask 80896
  %v133 = vsel %vm131, %v61, 0
  %v136 = vsel %vm131, %v62, 0
  %v139 = vsel %vm131, %v63, 0
  %v142 = vsel %vm131, %v64, 0
  %v145 = vsel %vm131, %v65, 0
  %v148 = vsel %vm131, %v66, 0
  %v151 = vsel %vm131, %v67, 0
  %v154 = vsel %vm131, %v68, 0
  %v157 = vsel %vm131, %v69, 0
  %v160 = vsel %vm131, %v70, 0
  %v163 = vsel %vm131, %v71, 0
  %v166 = vsel %vm131, %v72, 0
  %v169 = vsel %vm131, %v73, 0
  %v172 = vsel %vm131, %v74, 0
  %v175 = vsel %vm131, %v75, 0
  %v178 = vsel %vm131, %v76, 0
  %v181 = vsel %vm131, %v77, 0
  %v184 = vsel %vm131, %v78, 0
  %v187 = vsel %vm131, %v79, 0
  %v190 = vsel %vm131, %v80, 0
  %v193 = vsel %vm131, %v81, 0
  %v196 = vsel %vm131, %v82, 0
  %v199 = vsel %vm131, %v83, 0
  %v202 = vsel %vm131, %v84, 0
  %v205 = vsel %vm131, %v85, 0
  %v208 = vsel %vm131, %v86, 0
  %v211 = vsel %vm131, %v87, 0
  %v214 = vsel %vm131, %v88, 0
  %v217 = vsel %vm131, %v89, 0
  %v220 = vsel %vm131, %v90, 0
  %v223 = vsel %vm131, %v91, 0
  %v226 = vsel %vm131, %v92, 0
  %v229 = vsel %vm131, %v93, 0
  %v232 = vsel %vm131, %v94, 0
  %v235 = vsel %vm131, %v95, 0
  %v238 = vsel %vm131, %v96, 0
  %v241 = vsel %vm131, %v97, 0
  %v244 = vsel %vm131, %v98, 0
  %v247 = vsel %vm131, %v99, 0
  %v250 = vsel %vm131, %v100, 0
  %v253 = vsel %vm131, %v101, 0
  %v256 = vsel %vm131, %v102, 0
  %v259 = vsel %vm131, %v103, 0
  %v262 = vsel %vm131, %v104, 0
  %v265 = vsel %vm131, %v105, 0
  %v268 = vsel %vm131, %v106, 0
  %v271 = vsel %vm131, %v107, 0
  %v274 = vsel %vm131, %v108, 0
  %v277 = vsel %vm131, %v109, 0
  %v280 = vsel %vm131, %v110, 0
  %v283 = vsel %vm131, %v111, 0
  %v286 = vsel %vm131, %v112, 0
  %v289 = vsel %vm131, %v113, 0
  %v292 = vsel %vm131, %v114, 0
  %v295 = vsel %vm131, %v115, 0
  %v298 = vsel %vm131, %v116, 0
  %v301 = vsel %vm131, %v117, 0
  %v304 = vsel %vm131, %v118, 0
  %v307 = vsel %vm131, %v119, 0
  %v310 = vsel %vm131, %v120, 0
  %v313 = vsel %vm131, %v121, 0
  %v316 = vsel %vm131, %v122, 0
  %v319 = vsel %vm131, %v123, 0
  %v322 = vsel %vm131, %v124, 0
  %vm324 = vcmask 1041408
  %v326 = vsel %vm324, %v130, 0
  %328 = vmatprep.subr.mxu0 0.0
  %329 = vmatpush1.msra.mxu0 %v129
  %330 = vmatprep.subr.mxu0 0.0
  %331 = vmatpush1.msra.mxu0 %v326
  %332 = vmatprep.subr.mxu0 0.0
  %333 = vmatpush1.msra.mxu0 0.0
  %334 = vmatprep.subr.mxu0 0.0
  %335 = vmatpush1.msra.mxu0 0.0
  %336 = vmatprep.subr.mxu0 0.0
  %337 = vmatpush1.msra.mxu0 0.0
  %338 = vmatprep.subr.mxu0 0.0
  %339 = vmatpush1.msra.mxu0 0.0
  %340 = vmatprep.subr.mxu0 0.0
  %341 = vmatpush1.msra.mxu0 0.0
  %342 = vmatprep.subr.mxu0 0.0
  %343 = vmatpush1.msra.mxu0 0.0
  %344 = vmatprep.subr.mxu0 0.0
  %345 = vmatpush1.msra.mxu0 0.0
  %346 = vmatprep.subr.mxu0 0.0
  %347 = vmatpush1.msra.mxu0 0.0
  %348 = vmatprep.subr.mxu0 0.0
  %349 = vmatpush1.msra.mxu0 0.0
  %350 = vmatprep.subr.mxu0 0.0
  %351 = vmatpush1.msra.mxu0 0.0
  %352 = vmatprep.subr.mxu0 0.0
  %353 = vmatpush1.msra.mxu0 0.0
  %354 = vmatprep.subr.mxu0 0.0
  %355 = vmatpush1.msra.mxu0 0.0
  %356 = vmatprep.subr.mxu0 0.0
  %357 = vmatpush1.msra.mxu0 0.0
  %358 = vmatprep.subr.mxu0 0.0
  %359 = vmatpush1.msra.mxu0 0.0
  %360 = vmatprep.subr.mxu0 0.0
  %361 = vmatpush1.msra.mxu0 0.0
  %362 = vmatprep.subr.mxu0 0.0
  %363 = vmatpush1.msra.mxu0 0.0
  %364 = vmatprep.subr.mxu0 0.0
  %365 = vmatpush1.msra.mxu0 0.0
  %366 = vmatprep.subr.mxu0 0.0
  %367 = vmatpush1.msra.mxu0 0.0
  %368 = vmatprep.subr.mxu0 0.0
  %369 = vmatpush1.msra.mxu0 0.0
  %370 = vmatprep.subr.mxu0 0.0
  %371 = vmatpush1.msra.mxu0 0.0
  %372 = vmatprep.subr.mxu0 0.0
  %373 = vmatpush1.msra.mxu0 0.0
  %374 = vmatprep.subr.mxu0 0.0
  %375 = vmatpush1.msra.mxu0 0.0
  %376 = vmatprep.subr.mxu0 0.0
  %377 = vmatpush1.msra.mxu0 0.0
  %378 = vmatprep.subr.mxu0 0.0
  %379 = vmatpush1.msra.mxu0 0.0
  %380 = vmatprep.subr.mxu0 0.0
  %381 = vmatpush1.msra.mxu0 0.0
  %382 = vmatprep.subr.mxu0 0.0
  %383 = vmatpush1.msra.mxu0 0.0
  %384 = vmatprep.subr.mxu0 0.0
  %385 = vmatpush1.msra.mxu0 0.0
  %386 = vmatprep.subr.mxu0 0.0
  %387 = vmatpush1.msra.mxu0 0.0
  %388 = vmatprep.subr.mxu0 0.0
  %389 = vmatpush1.msra.mxu0 0.0
  %390 = vmatprep.subr.mxu0 0.0
  %391 = vmatpush1.msra.mxu0 0.0
  %392 = vmatprep.mubr.f32.mxu0 0.0
  %393 = vmatmul.mubr.f32.gmra.mrb[0].mxu0 %v133
  %v394 = vpop.f32.mrb[0].mxu0
  %v395 = vadd.f32 0.0, %v394
  %v396 = vpop.f32.mrb[0].mxu0
  %397 = vmatprep.mubr.f32.mxu0 0.0
  %398 = vmatmul.mubr.f32.gmra.mrb[0].mxu0 %v136
  %v399 = vpop.f32.mrb[0].mxu0
  %v400 = vadd.f32 0.0, %v399
  %v401 = vpop.f32.mrb[0].mxu0
  %402 = vmatprep.mubr.f32.mxu0 0.0
  %403 = vmatmul.mubr.f32.gmra.mrb[0].mxu0 %v139
  %v404 = vpop.f32.mrb[0].mxu0
  %v405 = vadd.f32 0.0, %v404
  %v406 = vpop.f32.mrb[0].mxu0
  %407 = vmatprep.mubr.f32.mxu0 0.0
  %408 = vmatmul.mubr.f32.gmra.mrb[0].mxu0 %v142
  %v409 = vpop.f32.mrb[0].mxu0
  %v410 = vadd.f32 0.0, %v409
  %v411 = vpop.f32.mrb[0].mxu0
  %412 = vmatprep.mubr.f32.mxu0 0.0
  %413 = vmatmul.mubr.f32.gmra.mrb[0].mxu0 %v145
  %v414 = vpop.f32.mrb[0].mxu0
  %v415 = vadd.f32 0.0, %v414
  %v416 = vpop.f32.mrb[0].mxu0
  %417 = vmatprep.mubr.f32.mxu0 0.0
  %418 = vmatmul.mubr.f32.gmra.mrb[0].mxu0 %v148
  %v419 = vpop.f32.mrb[0].mxu0
  %v420 = vadd.f32 0.0, %v419
  %v421 = vpop.f32.mrb[0].mxu0
  %422 = vmatprep.mubr.f32.mxu0 0.0
  %423 = vmatmul.mubr.f32.gmra.mrb[0].mxu0 %v151
  %v424 = vpop.f32.mrb[0].mxu0
  %v425 = vadd.f32 0.0, %v424
  %v426 = vpop.f32.mrb[0].mxu0
  %427 = vmatprep.mubr.f32.mxu0 0.0
  %428 = vmatmul.mubr.f32.gmra.mrb[0].mxu0 %v154
  %v429 = vpop.f32.mrb[0].mxu0
  %v430 = vadd.f32 0.0, %v429
  %v431 = vpop.f32.mrb[0].mxu0
  %432 = vmatprep.mubr.f32.mxu0 0.0
  %433 = vmatmul.mubr.f32.gmra.mrb[0].mxu0 %v157
  %v434 = vpop.f32.mrb[0].mxu0
  %v435 = vadd.f32 0.0, %v434
  %v436 = vpop.f32.mrb[0].mxu0
  %437 = vmatprep.mubr.f32.mxu0 0.0
  %438 = vmatmul.mubr.f32.gmra.mrb[0].mxu0 %v160
  %v439 = vpop.f32.mrb[0].mxu0
  %v440 = vadd.f32 0.0, %v439
  %v441 = vpop.f32.mrb[0].mxu0
  %442 = vmatprep.mubr.f32.mxu0 0.0
  %443 = vmatmul.mubr.f32.gmra.mrb[0].mxu0 %v163
  %v444 = vpop.f32.mrb[0].mxu0
  %v445 = vadd.f32 0.0, %v444
  %v446 = vpop.f32.mrb[0].mxu0
  %447 = vmatprep.mubr.f32.mxu0 0.0
  %448 = vmatmul.mubr.f32.gmra.mrb[0].mxu0 %v166
  %v449 = vpop.f32.mrb[0].mxu0
  %v450 = vadd.f32 0.0, %v449
  %v451 = vpop.f32.mrb[0].mxu0
  %452 = vmatprep.mubr.f32.mxu0 0.0
  %453 = vmatmul.mubr.f32.gmra.mrb[0].mxu0 %v169
  %v454 = vpop.f32.mrb[0].mxu0
  %v455 = vadd.f32 0.0, %v454
  %v456 = vpop.f32.mrb[0].mxu0
  %457 = vmatprep.mubr.f32.mxu0 0.0
  %458 = vmatmul.mubr.f32.gmra.mrb[0].mxu0 %v172
  %v459 = vpop.f32.mrb[0].mxu0
  %v460 = vadd.f32 0.0, %v459
  %v461 = vpop.f32.mrb[0].mxu0
  %462 = vmatprep.mubr.f32.mxu0 0.0
  %463 = vmatmul.mubr.f32.gmra.mrb[0].mxu0 %v175
  %v464 = vpop.f32.mrb[0].mxu0
  %v465 = vadd.f32 0.0, %v464
  %v466 = vpop.f32.mrb[0].mxu0
  %467 = vmatprep.mubr.f32.mxu0 0.0
  %468 = vmatmul.mubr.f32.gmra.mrb[0].mxu0 %v178
  %v469 = vpop.f32.mrb[0].mxu0
  %v470 = vadd.f32 0.0, %v469
  %v471 = vpop.f32.mrb[0].mxu0
  %472 = vmatprep.mubr.f32.mxu0 0.0
  %473 = vmatmul.mubr.f32.gmra.mrb[0].mxu0 %v181
  %v474 = vpop.f32.mrb[0].mxu0
  %v475 = vadd.f32 0.0, %v474
  %v476 = vpop.f32.mrb[0].mxu0
  %477 = vmatprep.mubr.f32.mxu0 0.0
  %478 = vmatmul.mubr.f32.gmra.mrb[0].mxu0 %v184
  %v479 = vpop.f32.mrb[0].mxu0
  %v480 = vadd.f32 0.0, %v479
  %v481 = vpop.f32.mrb[0].mxu0
  %482 = vmatprep.mubr.f32.mxu0 0.0
  %483 = vmatmul.mubr.f32.gmra.mrb[0].mxu0 %v187
  %v484 = vpop.f32.mrb[0].mxu0
  %v485 = vadd.f32 0.0, %v484
  %v486 = vpop.f32.mrb[0].mxu0
  %487 = vmatprep.mubr.f32.mxu0 0.0
  %488 = vmatmul.mubr.f32.gmra.mrb[0].mxu0 %v190
  %v489 = vpop.f32.mrb[0].mxu0
  %v490 = vadd.f32 0.0, %v489
  %v491 = vpop.f32.mrb[0].mxu0
  %492 = vmatprep.mubr.f32.mxu0 0.0
  %493 = vmatmul.mubr.f32.gmra.mrb[0].mxu0 %v193
  %v494 = vpop.f32.mrb[0].mxu0
  %v495 = vadd.f32 0.0, %v494
  %v496 = vpop.f32.mrb[0].mxu0
  %497 = vmatprep.mubr.f32.mxu0 0.0
  %498 = vmatmul.mubr.f32.gmra.mrb[0].mxu0 %v196
  %v499 = vpop.f32.mrb[0].mxu0
  %v500 = vadd.f32 0.0, %v499
  %v501 = vpop.f32.mrb[0].mxu0
  %502 = vmatprep.mubr.f32.mxu0 0.0
  %503 = vmatmul.mubr.f32.gmra.mrb[0].mxu0 %v199
  %v504 = vpop.f32.mrb[0].mxu0
  %v505 = vadd.f32 0.0, %v504
  %v506 = vpop.f32.mrb[0].mxu0
  %507 = vmatprep.mubr.f32.mxu0 0.0
  %508 = vmatmul.mubr.f32.gmra.mrb[0].mxu0 %v202
  %v509 = vpop.f32.mrb[0].mxu0
  %v510 = vadd.f32 0.0, %v509
  %v511 = vpop.f32.mrb[0].mxu0
  %512 = vmatprep.mubr.f32.mxu0 0.0
  %513 = vmatmul.mubr.f32.gmra.mrb[0].mxu0 %v205
  %v514 = vpop.f32.mrb[0].mxu0
  %v515 = vadd.f32 0.0, %v514
  %v516 = vpop.f32.mrb[0].mxu0
  %517 = vmatprep.mubr.f32.mxu0 0.0
  %518 = vmatmul.mubr.f32.gmra.mrb[0].mxu0 %v208
  %v519 = vpop.f32.mrb[0].mxu0
  %v520 = vadd.f32 0.0, %v519
  %v521 = vpop.f32.mrb[0].mxu0
  %522 = vmatprep.mubr.f32.mxu0 0.0
  %523 = vmatmul.mubr.f32.gmra.mrb[0].mxu0 %v211
  %v524 = vpop.f32.mrb[0].mxu0
  %v525 = vadd.f32 0.0, %v524
  %v526 = vpop.f32.mrb[0].mxu0
  %527 = vmatprep.mubr.f32.mxu0 0.0
  %528 = vmatmul.mubr.f32.gmra.mrb[0].mxu0 %v214
  %v529 = vpop.f32.mrb[0].mxu0
  %v530 = vadd.f32 0.0, %v529
  %v531 = vpop.f32.mrb[0].mxu0
  %532 = vmatprep.mubr.f32.mxu0 0.0
  %533 = vmatmul.mubr.f32.gmra.mrb[0].mxu0 %v217
  %v534 = vpop.f32.mrb[0].mxu0
  %v535 = vadd.f32 0.0, %v534
  %v536 = vpop.f32.mrb[0].mxu0
  %537 = vmatprep.mubr.f32.mxu0 0.0
  %538 = vmatmul.mubr.f32.gmra.mrb[0].mxu0 %v220
  %v539 = vpop.f32.mrb[0].mxu0
  %v540 = vadd.f32 0.0, %v539
  %v541 = vpop.f32.mrb[0].mxu0
  %542 = vmatprep.mubr.f32.mxu0 0.0
  %543 = vmatmul.mubr.f32.gmra.mrb[0].mxu0 %v223
  %v544 = vpop.f32.mrb[0].mxu0
  %v545 = vadd.f32 0.0, %v544
  %v546 = vpop.f32.mrb[0].mxu0
  %547 = vmatprep.mubr.f32.mxu0 0.0
  %548 = vmatmul.mubr.f32.gmra.mrb[0].mxu0 %v226
  %v549 = vpop.f32.mrb[0].mxu0
  %v550 = vadd.f32 0.0, %v549
  %v551 = vpop.f32.mrb[0].mxu0
  %552 = vmatprep.mubr.f32.mxu0 0.0
  %553 = vmatmul.mubr.f32.gmra.mrb[0].mxu0 %v229
  %v554 = vpop.f32.mrb[0].mxu0
  %v555 = vadd.f32 0.0, %v554
  %v556 = vpop.f32.mrb[0].mxu0
  %557 = vmatprep.mubr.f32.mxu0 0.0
  %558 = vmatmul.mubr.f32.gmra.mrb[0].mxu0 %v232
  %v559 = vpop.f32.mrb[0].mxu0
  %v560 = vadd.f32 0.0, %v559
  %v561 = vpop.f32.mrb[0].mxu0
  %562 = vmatprep.mubr.f32.mxu0 0.0
  %563 = vmatmul.mubr.f32.gmra.mrb[0].mxu0 %v235
  %v564 = vpop.f32.mrb[0].mxu0
  %v565 = vadd.f32 0.0, %v564
  %v566 = vpop.f32.mrb[0].mxu0
  %567 = vmatprep.mubr.f32.mxu0 0.0
  %568 = vmatmul.mubr.f32.gmra.mrb[0].mxu0 %v238
  %v569 = vpop.f32.mrb[0].mxu0
  %v570 = vadd.f32 0.0, %v569
  %v571 = vpop.f32.mrb[0].mxu0
  %572 = vmatprep.mubr.f32.mxu0 0.0
  %573 = vmatmul.mubr.f32.gmra.mrb[0].mxu0 %v241
  %v574 = vpop.f32.mrb[0].mxu0
  %v575 = vadd.f32 0.0, %v574
  %v576 = vpop.f32.mrb[0].mxu0
  %577 = vmatprep.mubr.f32.mxu0 0.0
  %578 = vmatmul.mubr.f32.gmra.mrb[0].mxu0 %v244
  %v579 = vpop.f32.mrb[0].mxu0
  %v580 = vadd.f32 0.0, %v579
  %v581 = vpop.f32.mrb[0].mxu0
  %582 = vmatprep.mubr.f32.mxu0 0.0
  %583 = vmatmul.mubr.f32.gmra.mrb[0].mxu0 %v247
  %v584 = vpop.f32.mrb[0].mxu0
  %v585 = vadd.f32 0.0, %v584
  %v586 = vpop.f32.mrb[0].mxu0
  %587 = vmatprep.mubr.f32.mxu0 0.0
  %588 = vmatmul.mubr.f32.gmra.mrb[0].mxu0 %v250
  %v589 = vpop.f32.mrb[0].mxu0
  %v590 = vadd.f32 0.0, %v589
  %v591 = vpop.f32.mrb[0].mxu0
  %592 = vmatprep.mubr.f32.mxu0 0.0
  %593 = vmatmul.mubr.f32.gmra.mrb[0].mxu0 %v253
  %v594 = vpop.f32.mrb[0].mxu0
  %v595 = vadd.f32 0.0, %v594
  %v596 = vpop.f32.mrb[0].mxu0
  %597 = vmatprep.mubr.f32.mxu0 0.0
  %598 = vmatmul.mubr.f32.gmra.mrb[0].mxu0 %v256
  %v599 = vpop.f32.mrb[0].mxu0
  %v600 = vadd.f32 0.0, %v599
  %v601 = vpop.f32.mrb[0].mxu0
  %602 = vmatprep.mubr.f32.mxu0 0.0
  %603 = vmatmul.mubr.f32.gmra.mrb[0].mxu0 %v259
  %v604 = vpop.f32.mrb[0].mxu0
  %v605 = vadd.f32 0.0, %v604
  %v606 = vpop.f32.mrb[0].mxu0
  %607 = vmatprep.mubr.f32.mxu0 0.0
  %608 = vmatmul.mubr.f32.gmra.mrb[0].mxu0 %v262
  %v609 = vpop.f32.mrb[0].mxu0
  %v610 = vadd.f32 0.0, %v609
  %v611 = vpop.f32.mrb[0].mxu0
  %612 = vmatprep.mubr.f32.mxu0 0.0
  %613 = vmatmul.mubr.f32.gmra.mrb[0].mxu0 %v265
  %v614 = vpop.f32.mrb[0].mxu0
  %v615 = vadd.f32 0.0, %v614
  %v616 = vpop.f32.mrb[0].mxu0
  %617 = vmatprep.mubr.f32.mxu0 0.0
  %618 = vmatmul.mubr.f32.gmra.mrb[0].mxu0 %v268
  %v619 = vpop.f32.mrb[0].mxu0
  %v620 = vadd.f32 0.0, %v619
  %v621 = vpop.f32.mrb[0].mxu0
  %622 = vmatprep.mubr.f32.mxu0 0.0
  %623 = vmatmul.mubr.f32.gmra.mrb[0].mxu0 %v271
  %v624 = vpop.f32.mrb[0].mxu0
  %v625 = vadd.f32 0.0, %v624
  %v626 = vpop.f32.mrb[0].mxu0
  %627 = vmatprep.mubr.f32.mxu0 0.0
  %628 = vmatmul.mubr.f32.gmra.mrb[0].mxu0 %v274
  %v629 = vpop.f32.mrb[0].mxu0
  %v630 = vadd.f32 0.0, %v629
  %v631 = vpop.f32.mrb[0].mxu0
  %632 = vmatprep.mubr.f32.mxu0 0.0
  %633 = vmatmul.mubr.f32.gmra.mrb[0].mxu0 %v277
  %v634 = vpop.f32.mrb[0].mxu0
  %v635 = vadd.f32 0.0, %v634
  %v636 = vpop.f32.mrb[0].mxu0
  %637 = vmatprep.mubr.f32.mxu0 0.0
  %638 = vmatmul.mubr.f32.gmra.mrb[0].mxu0 %v280
  %v639 = vpop.f32.mrb[0].mxu0
  %v640 = vadd.f32 0.0, %v639
  %v641 = vpop.f32.mrb[0].mxu0
  %642 = vmatprep.mubr.f32.mxu0 0.0
  %643 = vmatmul.mubr.f32.gmra.mrb[0].mxu0 %v283
  %v644 = vpop.f32.mrb[0].mxu0
  %v645 = vadd.f32 0.0, %v644
  %v646 = vpop.f32.mrb[0].mxu0
  %647 = vmatprep.mubr.f32.mxu0 0.0
  %648 = vmatmul.mubr.f32.gmra.mrb[0].mxu0 %v286
  %v649 = vpop.f32.mrb[0].mxu0
  %v650 = vadd.f32 0.0, %v649
  %v651 = vpop.f32.mrb[0].mxu0
  %652 = vmatprep.mubr.f32.mxu0 0.0
  %653 = vmatmul.mubr.f32.gmra.mrb[0].mxu0 %v289
  %v654 = vpop.f32.mrb[0].mxu0
  %v655 = vadd.f32 0.0, %v654
  %v656 = vpop.f32.mrb[0].mxu0
  %657 = vmatprep.mubr.f32.mxu0 0.0
  %658 = vmatmul.mubr.f32.gmra.mrb[0].mxu0 %v292
  %v659 = vpop.f32.mrb[0].mxu0
  %v660 = vadd.f32 0.0, %v659
  %v661 = vpop.f32.mrb[0].mxu0
  %662 = vmatprep.mubr.f32.mxu0 0.0
  %663 = vmatmul.mubr.f32.gmra.mrb[0].mxu0 %v295
  %v664 = vpop.f32.mrb[0].mxu0
  %v665 = vadd.f32 0.0, %v664
  %v666 = vpop.f32.mrb[0].mxu0
  %667 = vmatprep.mubr.f32.mxu0 0.0
  %668 = vmatmul.mubr.f32.gmra.mrb[0].mxu0 %v298
  %v669 = vpop.f32.mrb[0].mxu0
  %v670 = vadd.f32 0.0, %v669
  %v671 = vpop.f32.mrb[0].mxu0
  %672 = vmatprep.mubr.f32.mxu0 0.0
  %673 = vmatmul.mubr.f32.gmra.mrb[0].mxu0 %v301
  %v674 = vpop.f32.mrb[0].mxu0
  %v675 = vadd.f32 0.0, %v674
  %v676 = vpop.f32.mrb[0].mxu0
  %677 = vmatprep.mubr.f32.mxu0 0.0
  %678 = vmatmul.mubr.f32.gmra.mrb[0].mxu0 %v304
  %v679 = vpop.f32.mrb[0].mxu0
  %v680 = vadd.f32 0.0, %v679
  %v681 = vpop.f32.mrb[0].mxu0
  %682 = vmatprep.mubr.f32.mxu0 0.0
  %683 = vmatmul.mubr.f32.gmra.mrb[0].mxu0 %v307
  %v684 = vpop.f32.mrb[0].mxu0
  %v685 = vadd.f32 0.0, %v684
  %v686 = vpop.f32.mrb[0].mxu0
  %687 = vmatprep.mubr.f32.mxu0 0.0
  %688 = vmatmul.mubr.f32.gmra.mrb[0].mxu0 %v310
  %v689 = vpop.f32.mrb[0].mxu0
  %v690 = vadd.f32 0.0, %v689
  %v691 = vpop.f32.mrb[0].mxu0
  %692 = vmatprep.mubr.f32.mxu0 0.0
  %693 = vmatmul.mubr.f32.gmra.mrb[0].mxu0 %v313
  %v694 = vpop.f32.mrb[0].mxu0
  %v695 = vadd.f32 0.0, %v694
  %v696 = vpop.f32.mrb[0].mxu0
  %697 = vmatprep.mubr.f32.mxu0 0.0
  %698 = vmatmul.mubr.f32.gmra.mrb[0].mxu0 %v316
  %v699 = vpop.f32.mrb[0].mxu0
  %v700 = vadd.f32 0.0, %v699
  %v701 = vpop.f32.mrb[0].mxu0
  %702 = vmatprep.mubr.f32.mxu0 0.0
  %703 = vmatmul.mubr.f32.gmra.mrb[0].mxu0 %v319
  %v704 = vpop.f32.mrb[0].mxu0
  %v705 = vadd.f32 0.0, %v704
  %v706 = vpop.f32.mrb[0].mxu0
  %707 = vmatprep.mubr.f32.mxu0 0.0
  %708 = vmatmul.mubr.f32.gmra.mrb[0].mxu0 %v322
  %v709 = vpop.f32.mrb[0].mxu0
  %v710 = vadd.f32 0.0, %v709
  %v711 = vpop.f32.mrb[0].mxu0
  %712 = vdwg.mxu0
  %v713 = vmax.f32 %v395, 0.0
  %v714 = vmax.f32 %v400, 0.0
  %v715 = vmax.f32 %v405, 0.0
  %v716 = vmax.f32 %v410, 0.0
  %v717 = vmax.f32 %v415, 0.0
  %v718 = vmax.f32 %v420, 0.0
  %v719 = vmax.f32 %v425, 0.0
  %v720 = vmax.f32 %v430, 0.0
  %v721 = vmax.f32 %v435, 0.0
  %v722 = vmax.f32 %v440, 0.0
  %v723 = vmax.f32 %v445, 0.0
  %v724 = vmax.f32 %v450, 0.0
  %v725 = vmax.f32 %v455, 0.0
  %v726 = vmax.f32 %v460, 0.0
  %v727 = vmax.f32 %v465, 0.0
  %v728 = vmax.f32 %v470, 0.0
  %v729 = vmax.f32 %v475, 0.0
  %v730 = vmax.f32 %v480, 0.0
  %v731 = vmax.f32 %v485, 0.0
  %v732 = vmax.f32 %v490, 0.0
  %v733 = vmax.f32 %v495, 0.0
  %v734 = vmax.f32 %v500, 0.0
  %v735 = vmax.f32 %v505, 0.0
  %v736 = vmax.f32 %v510, 0.0
  %v737 = vmax.f32 %v515, 0.0
  %v738 = vmax.f32 %v520, 0.0
  %v739 = vmax.f32 %v525, 0.0
  %v740 = vmax.f32 %v530, 0.0
  %v741 = vmax.f32 %v535, 0.0
  %v742 = vmax.f32 %v540, 0.0
  %v743 = vmax.f32 %v545, 0.0
  %v744 = vmax.f32 %v550, 0.0
  %v745 = vmax.f32 %v555, 0.0
  %v746 = vmax.f32 %v560, 0.0
  %v747 = vmax.f32 %v565, 0.0
  %v748 = vmax.f32 %v570, 0.0
  %v749 = vmax.f32 %v575, 0.0
  %v750 = vmax.f32 %v580, 0.0
  %v751 = vmax.f32 %v585, 0.0
  %v752 = vmax.f32 %v590, 0.0
  %v753 = vmax.f32 %v595, 0.0
  %v754 = vmax.f32 %v600, 0.0
  %v755 = vmax.f32 %v605, 0.0
  %v756 = vmax.f32 %v610, 0.0
  %v757 = vmax.f32 %v615, 0.0
  %v758 = vmax.f32 %v620, 0.0
  %v759 = vmax.f32 %v625, 0.0
  %v760 = vmax.f32 %v630, 0.0
  %v761 = vmax.f32 %v635, 0.0
  %v762 = vmax.f32 %v640, 0.0
  %v763 = vmax.f32 %v645, 0.0
  %v764 = vmax.f32 %v650, 0.0
  %v765 = vmax.f32 %v655, 0.0
  %v766 = vmax.f32 %v660, 0.0
  %v767 = vmax.f32 %v665, 0.0
  %v768 = vmax.f32 %v670, 0.0
  %v769 = vmax.f32 %v675, 0.0
  %v770 = vmax.f32 %v680, 0.0
  %v771 = vmax.f32 %v685, 0.0
  %v772 = vmax.f32 %v690, 0.0
  %v773 = vmax.f32 %v695, 0.0
  %v774 = vmax.f32 %v700, 0.0
  %v775 = vmax.f32 %v705, 0.0
  %v776 = vmax.f32 %v710, 0.0
  %v777 = vlaneseq
  %v778 = vand.u32 %v777, 127
  %v779 = vcvt.s32.f32 %v778
  %780 = vset.pattern.permute.xlu0 10
  %781 = vperm.xlu0 %780, %v61
  %v782 = vpop.permute.xlu0 %781
  %784 = vset.pattern.permute.xlu0 10
  %785 = vperm.xlu0 %784, %v62
  %v786 = vpop.permute.xlu0 %785
  %788 = vset.pattern.permute.xlu0 10
  %789 = vperm.xlu0 %788, %v63
  %v790 = vpop.permute.xlu0 %789
  %792 = vset.pattern.permute.xlu0 10
  %793 = vperm.xlu0 %792, %v64
  %v794 = vpop.permute.xlu0 %793
  %796 = vset.pattern.permute.xlu0 10
  %797 = vperm.xlu0 %796, %v65
  %v798 = vpop.permute.xlu0 %797
  %800 = vset.pattern.permute.xlu0 10
  %801 = vperm.xlu0 %800, %v66
  %v802 = vpop.permute.xlu0 %801
  %804 = vset.pattern.permute.xlu0 10
  %805 = vperm.xlu0 %804, %v67
  %v806 = vpop.permute.xlu0 %805
  %808 = vset.pattern.permute.xlu0 10
  %809 = vperm.xlu0 %808, %v68
  %v810 = vpop.permute.xlu0 %809
  %812 = vset.pattern.permute.xlu0 10
  %813 = vperm.xlu0 %812, %v69
  %v814 = vpop.permute.xlu0 %813
  %816 = vset.pattern.permute.xlu0 10
  %817 = vperm.xlu0 %816, %v70
  %v818 = vpop.permute.xlu0 %817
  %820 = vset.pattern.permute.xlu0 10
  %821 = vperm.xlu0 %820, %v71
  %v822 = vpop.permute.xlu0 %821
  %824 = vset.pattern.permute.xlu0 10
  %825 = vperm.xlu0 %824, %v72
  %v826 = vpop.permute.xlu0 %825
  %828 = vset.pattern.permute.xlu0 10
  %829 = vperm.xlu0 %828, %v73
  %v830 = vpop.permute.xlu0 %829
  %832 = vset.pattern.permute.xlu0 10
  %833 = vperm.xlu0 %832, %v74
  %v834 = vpop.permute.xlu0 %833
  %836 = vset.pattern.permute.xlu0 10
  %837 = vperm.xlu0 %836, %v75
  %v838 = vpop.permute.xlu0 %837
  %840 = vset.pattern.permute.xlu0 10
  %841 = vperm.xlu0 %840, %v76
  %v842 = vpop.permute.xlu0 %841
  %844 = vset.pattern.permute.xlu0 10
  %845 = vperm.xlu0 %844, %v77
  %v846 = vpop.permute.xlu0 %845
  %848 = vset.pattern.permute.xlu0 10
  %849 = vperm.xlu0 %848, %v78
  %v850 = vpop.permute.xlu0 %849
  %852 = vset.pattern.permute.xlu0 10
  %853 = vperm.xlu0 %852, %v79
  %v854 = vpop.permute.xlu0 %853
  %856 = vset.pattern.permute.xlu0 10
  %857 = vperm.xlu0 %856, %v80
  %v858 = vpop.permute.xlu0 %857
  %860 = vset.pattern.permute.xlu0 10
  %861 = vperm.xlu0 %860, %v81
  %v862 = vpop.permute.xlu0 %861
  %864 = vset.pattern.permute.xlu0 10
  %865 = vperm.xlu0 %864, %v82
  %v866 = vpop.permute.xlu0 %865
  %868 = vset.pattern.permute.xlu0 10
  %869 = vperm.xlu0 %868, %v83
  %v870 = vpop.permute.xlu0 %869
  %872 = vset.pattern.permute.xlu0 10
  %873 = vperm.xlu0 %872, %v84
  %v874 = vpop.permute.xlu0 %873
  %876 = vset.pattern.permute.xlu0 10
  %877 = vperm.xlu0 %876, %v85
  %v878 = vpop.permute.xlu0 %877
  %880 = vset.pattern.permute.xlu0 10
  %881 = vperm.xlu0 %880, %v86
  %v882 = vpop.permute.xlu0 %881
  %884 = vset.pattern.permute.xlu0 10
  %885 = vperm.xlu0 %884, %v87
  %v886 = vpop.permute.xlu0 %885
  %888 = vset.pattern.permute.xlu0 10
  %889 = vperm.xlu0 %888, %v88
  %v890 = vpop.permute.xlu0 %889
  %892 = vset.pattern.permute.xlu0 10
  %893 = vperm.xlu0 %892, %v89
  %v894 = vpop.permute.xlu0 %893
  %896 = vset.pattern.permute.xlu0 10
  %897 = vperm.xlu0 %896, %v90
  %v898 = vpop.permute.xlu0 %897
  %900 = vset.pattern.permute.xlu0 10
  %901 = vperm.xlu0 %900, %v91
  %v902 = vpop.permute.xlu0 %901
  %904 = vset.pattern.permute.xlu0 10
  %905 = vperm.xlu0 %904, %v92
  %v906 = vpop.permute.xlu0 %905
  %908 = vset.pattern.permute.xlu0 10
  %909 = vperm.xlu0 %908, %v93
  %v910 = vpop.permute.xlu0 %909
  %912 = vset.pattern.permute.xlu0 10
  %913 = vperm.xlu0 %912, %v94
  %v914 = vpop.permute.xlu0 %913
  %916 = vset.pattern.permute.xlu0 10
  %917 = vperm.xlu0 %916, %v95
  %v918 = vpop.permute.xlu0 %917
  %920 = vset.pattern.permute.xlu0 10
  %921 = vperm.xlu0 %920, %v96
  %v922 = vpop.permute.xlu0 %921
  %924 = vset.pattern.permute.xlu0 10
  %925 = vperm.xlu0 %924, %v97
  %v926 = vpop.permute.xlu0 %925
  %928 = vset.pattern.permute.xlu0 10
  %929 = vperm.xlu0 %928, %v98
  %v930 = vpop.permute.xlu0 %929
  %932 = vset.pattern.permute.xlu0 10
  %933 = vperm.xlu0 %932, %v99
  %v934 = vpop.permute.xlu0 %933
  %936 = vset.pattern.permute.xlu0 10
  %937 = vperm.xlu0 %936, %v100
  %v938 = vpop.permute.xlu0 %937
  %940 = vset.pattern.permute.xlu0 10
  %941 = vperm.xlu0 %940, %v101
  %v942 = vpop.permute.xlu0 %941
  %944 = vset.pattern.permute.xlu0 10
  %945 = vperm.xlu0 %944, %v102
  %v946 = vpop.permute.xlu0 %945
  %948 = vset.pattern.permute.xlu0 10
  %949 = vperm.xlu0 %948, %v103
  %v950 = vpop.permute.xlu0 %949
  %952 = vset.pattern.permute.xlu0 10
  %953 = vperm.xlu0 %952, %v104
  %v954 = vpop.permute.xlu0 %953
  %956 = vset.pattern.permute.xlu0 10
  %957 = vperm.xlu0 %956, %v105
  %v958 = vpop.permute.xlu0 %957
  %960 = vset.pattern.permute.xlu0 10
  %961 = vperm.xlu0 %960, %v106
  %v962 = vpop.permute.xlu0 %961
  %964 = vset.pattern.permute.xlu0 10
  %965 = vperm.xlu0 %964, %v107
  %v966 = vpop.permute.xlu0 %965
  %968 = vset.pattern.permute.xlu0 10
  %969 = vperm.xlu0 %968, %v108
  %v970 = vpop.permute.xlu0 %969
  %972 = vset.pattern.permute.xlu0 10
  %973 = vperm.xlu0 %972, %v109
  %v974 = vpop.permute.xlu0 %973
  %976 = vset.pattern.permute.xlu0 10
  %977 = vperm.xlu0 %976, %v110
  %v978 = vpop.permute.xlu0 %977
  %980 = vset.pattern.permute.xlu0 10
  %981 = vperm.xlu0 %980, %v111
  %v982 = vpop.permute.xlu0 %981
  %984 = vset.pattern.permute.xlu0 10
  %985 = vperm.xlu0 %984, %v112
  %v986 = vpop.permute.xlu0 %985
  %988 = vset.pattern.permute.xlu0 10
  %989 = vperm.xlu0 %988, %v113
  %v990 = vpop.permute.xlu0 %989
  %992 = vset.pattern.permute.xlu0 10
  %993 = vperm.xlu0 %992, %v114
  %v994 = vpop.permute.xlu0 %993
  %996 = vset.pattern.permute.xlu0 10
  %997 = vperm.xlu0 %996, %v115
  %v998 = vpop.permute.xlu0 %997
  %1000 = vset.pattern.permute.xlu0 10
  %1001 = vperm.xlu0 %1000, %v116
  %v1002 = vpop.permute.xlu0 %1001
  %1004 = vset.pattern.permute.xlu0 10
  %1005 = vperm.xlu0 %1004, %v117
  %v1006 = vpop.permute.xlu0 %1005
  %1008 = vset.pattern.permute.xlu0 10
  %1009 = vperm.xlu0 %1008, %v118
  %v1010 = vpop.permute.xlu0 %1009
  %1012 = vset.pattern.permute.xlu0 10
  %1013 = vperm.xlu0 %1012, %v119
  %v1014 = vpop.permute.xlu0 %1013
  %1016 = vset.pattern.permute.xlu0 10
  %1017 = vperm.xlu0 %1016, %v120
  %v1018 = vpop.permute.xlu0 %1017
  %1020 = vset.pattern.permute.xlu0 10
  %1021 = vperm.xlu0 %1020, %v121
  %v1022 = vpop.permute.xlu0 %1021
  %1024 = vset.pattern.permute.xlu0 10
  %1025 = vperm.xlu0 %1024, %v122
  %v1026 = vpop.permute.xlu0 %1025
  %1028 = vset.pattern.permute.xlu0 10
  %1029 = vperm.xlu0 %1028, %v123
  %v1030 = vpop.permute.xlu0 %1029
  %1032 = vset.pattern.permute.xlu0 10
  %1033 = vperm.xlu0 %1032, %v124
  %v1034 = vpop.permute.xlu0 %1033
  %vm1036 = vcmp.eq.f32.partialorder %v782, %v779
  %vm1037 = vcmp.eq.f32.partialorder %v786, %v779
  %vm1038 = vcmp.eq.f32.partialorder %v790, %v779
  %vm1039 = vcmp.eq.f32.partialorder %v794, %v779
  %vm1040 = vcmp.eq.f32.partialorder %v798, %v779
  %vm1041 = vcmp.eq.f32.partialorder %v802, %v779
  %vm1042 = vcmp.eq.f32.partialorder %v806, %v779
  %vm1043 = vcmp.eq.f32.partialorder %v810, %v779
  %vm1044 = vcmp.eq.f32.partialorder %v814, %v779
  %vm1045 = vcmp.eq.f32.partialorder %v818, %v779
  %vm1046 = vcmp.eq.f32.partialorder %v822, %v779
  %vm1047 = vcmp.eq.f32.partialorder %v826, %v779
  %vm1048 = vcmp.eq.f32.partialorder %v830, %v779
  %vm1049 = vcmp.eq.f32.partialorder %v834, %v779
  %vm1050 = vcmp.eq.f32.partialorder %v838, %v779
  %vm1051 = vcmp.eq.f32.partialorder %v842, %v779
  %vm1052 = vcmp.eq.f32.partialorder %v846, %v779
  %vm1053 = vcmp.eq.f32.partialorder %v850, %v779
  %vm1054 = vcmp.eq.f32.partialorder %v854, %v779
  %vm1055 = vcmp.eq.f32.partialorder %v858, %v779
  %vm1056 = vcmp.eq.f32.partialorder %v862, %v779
  %vm1057 = vcmp.eq.f32.partialorder %v866, %v779
  %vm1058 = vcmp.eq.f32.partialorder %v870, %v779
  %vm1059 = vcmp.eq.f32.partialorder %v874, %v779
  %vm1060 = vcmp.eq.f32.partialorder %v878, %v779
  %vm1061 = vcmp.eq.f32.partialorder %v882, %v779
  %vm1062 = vcmp.eq.f32.partialorder %v886, %v779
  %vm1063 = vcmp.eq.f32.partialorder %v890, %v779
  %vm1064 = vcmp.eq.f32.partialorder %v894, %v779
  %vm1065 = vcmp.eq.f32.partialorder %v898, %v779
  %vm1066 = vcmp.eq.f32.partialorder %v902, %v779
  %vm1067 = vcmp.eq.f32.partialorder %v906, %v779
  %vm1068 = vcmp.eq.f32.partialorder %v910, %v779
  %vm1069 = vcmp.eq.f32.partialorder %v914, %v779
  %vm1070 = vcmp.eq.f32.partialorder %v918, %v779
  %vm1071 = vcmp.eq.f32.partialorder %v922, %v779
  %vm1072 = vcmp.eq.f32.partialorder %v926, %v779
  %vm1073 = vcmp.eq.f32.partialorder %v930, %v779
  %vm1074 = vcmp.eq.f32.partialorder %v934, %v779
  %vm1075 = vcmp.eq.f32.partialorder %v938, %v779
  %vm1076 = vcmp.eq.f32.partialorder %v942, %v779
  %vm1077 = vcmp.eq.f32.partialorder %v946, %v779
  %vm1078 = vcmp.eq.f32.partialorder %v950, %v779
  %vm1079 = vcmp.eq.f32.partialorder %v954, %v779
  %vm1080 = vcmp.eq.f32.partialorder %v958, %v779
  %vm1081 = vcmp.eq.f32.partialorder %v962, %v779
  %vm1082 = vcmp.eq.f32.partialorder %v966, %v779
  %vm1083 = vcmp.eq.f32.partialorder %v970, %v779
  %vm1084 = vcmp.eq.f32.partialorder %v974, %v779
  %vm1085 = vcmp.eq.f32.partialorder %v978, %v779
  %vm1086 = vcmp.eq.f32.partialorder %v982, %v779
  %vm1087 = vcmp.eq.f32.partialorder %v986, %v779
  %vm1088 = vcmp.eq.f32.partialorder %v990, %v779
  %vm1089 = vcmp.eq.f32.partialorder %v994, %v779
  %vm1090 = vcmp.eq.f32.partialorder %v998, %v779
  %vm1091 = vcmp.eq.f32.partialorder %v1002, %v779
  %vm1092 = vcmp.eq.f32.partialorder %v1006, %v779
  %vm1093 = vcmp.eq.f32.partialorder %v1010, %v779
  %vm1094 = vcmp.eq.f32.partialorder %v1014, %v779
  %vm1095 = vcmp.eq.f32.partialorder %v1018, %v779
  %vm1096 = vcmp.eq.f32.partialorder %v1022, %v779
  %vm1097 = vcmp.eq.f32.partialorder %v1026, %v779
  %vm1098 = vcmp.eq.f32.partialorder %v1030, %v779
  %vm1099 = vcmp.eq.f32.partialorder %v1034, %v779
  %vm1100 = vmxor %vm1036, 1
  %vm1101 = vmxor %vm1037, 1
  %vm1102 = vmxor %vm1038, 1
  %vm1103 = vmxor %vm1039, 1
  %vm1104 = vmxor %vm1040, 1
  %vm1105 = vmxor %vm1041, 1
  %vm1106 = vmxor %vm1042, 1
  %vm1107 = vmxor %vm1043, 1
  %vm1108 = vmxor %vm1044, 1
  %vm1109 = vmxor %vm1045, 1
  %vm1110 = vmxor %vm1046, 1
  %vm1111 = vmxor %vm1047, 1
  %vm1112 = vmxor %vm1048, 1
  %vm1113 = vmxor %vm1049, 1
  %vm1114 = vmxor %vm1050, 1
  %vm1115 = vmxor %vm1051, 1
  %vm1116 = vmxor %vm1052, 1
  %vm1117 = vmxor %vm1053, 1
  %vm1118 = vmxor %vm1054, 1
  %vm1119 = vmxor %vm1055, 1
  %vm1120 = vmxor %vm1056, 1
  %vm1121 = vmxor %vm1057, 1
  %vm1122 = vmxor %vm1058, 1
  %vm1123 = vmxor %vm1059, 1
  %vm1124 = vmxor %vm1060, 1
  %vm1125 = vmxor %vm1061, 1
  %vm1126 = vmxor %vm1062, 1
  %vm1127 = vmxor %vm1063, 1
  %vm1128 = vmxor %vm1064, 1
  %vm1129 = vmxor %vm1065, 1
  %vm1130 = vmxor %vm1066, 1
  %vm1131 = vmxor %vm1067, 1
  %vm1132 = vmxor %vm1068, 1
  %vm1133 = vmxor %vm1069, 1
  %vm1134 = vmxor %vm1070, 1
  %vm1135 = vmxor %vm1071, 1
  %vm1136 = vmxor %vm1072, 1
  %vm1137 = vmxor %vm1073, 1
  %vm1138 = vmxor %vm1074, 1
  %vm1139 = vmxor %vm1075, 1
  %vm1140 = vmxor %vm1076, 1
  %vm1141 = vmxor %vm1077, 1
  %vm1142 = vmxor %vm1078, 1
  %vm1143 = vmxor %vm1079, 1
  %vm1144 = vmxor %vm1080, 1
  %vm1145 = vmxor %vm1081, 1
  %vm1146 = vmxor %vm1082, 1
  %vm1147 = vmxor %vm1083, 1
  %vm1148 = vmxor %vm1084, 1
  %vm1149 = vmxor %vm1085, 1
  %vm1150 = vmxor %vm1086, 1
  %vm1151 = vmxor %vm1087, 1
  %vm1152 = vmxor %vm1088, 1
  %vm1153 = vmxor %vm1089, 1
  %vm1154 = vmxor %vm1090, 1
  %vm1155 = vmxor %vm1091, 1
  %vm1156 = vmxor %vm1092, 1
  %vm1157 = vmxor %vm1093, 1
  %vm1158 = vmxor %vm1094, 1
  %vm1159 = vmxor %vm1095, 1
  %vm1160 = vmxor %vm1096, 1
  %vm1161 = vmxor %vm1097, 1
  %vm1162 = vmxor %vm1098, 1
  %vm1163 = vmxor %vm1099, 1
  %vm1164 = vcmp.lt.f32.partialorder %v713, 1.0
  %vm1165 = vcmp.lt.f32.partialorder %v714, 1.0
  %vm1166 = vcmp.lt.f32.partialorder %v715, 1.0
  %vm1167 = vcmp.lt.f32.partialorder %v716, 1.0
  %vm1168 = vcmp.lt.f32.partialorder %v717, 1.0
  %vm1169 = vcmp.lt.f32.partialorder %v718, 1.0
  %vm1170 = vcmp.lt.f32.partialorder %v719, 1.0
  %vm1171 = vcmp.lt.f32.partialorder %v720, 1.0
  %vm1172 = vcmp.lt.f32.partialorder %v721, 1.0
  %vm1173 = vcmp.lt.f32.partialorder %v722, 1.0
  %vm1174 = vcmp.lt.f32.partialorder %v723, 1.0
  %vm1175 = vcmp.lt.f32.partialorder %v724, 1.0
  %vm1176 = vcmp.lt.f32.partialorder %v725, 1.0
  %vm1177 = vcmp.lt.f32.partialorder %v726, 1.0
  %vm1178 = vcmp.lt.f32.partialorder %v727, 1.0
  %vm1179 = vcmp.lt.f32.partialorder %v728, 1.0
  %vm1180 = vcmp.lt.f32.partialorder %v729, 1.0
  %vm1181 = vcmp.lt.f32.partialorder %v730, 1.0
  %vm1182 = vcmp.lt.f32.partialorder %v731, 1.0
  %vm1183 = vcmp.lt.f32.partialorder %v732, 1.0
  %vm1184 = vcmp.lt.f32.partialorder %v733, 1.0
  %vm1185 = vcmp.lt.f32.partialorder %v734, 1.0
  %vm1186 = vcmp.lt.f32.partialorder %v735, 1.0
  %vm1187 = vcmp.lt.f32.partialorder %v736, 1.0
  %vm1188 = vcmp.lt.f32.partialorder %v737, 1.0
  %vm1189 = vcmp.lt.f32.partialorder %v738, 1.0
  %vm1190 = vcmp.lt.f32.partialorder %v739, 1.0
  %vm1191 = vcmp.lt.f32.partialorder %v740, 1.0
  %vm1192 = vcmp.lt.f32.partialorder %v741, 1.0
  %vm1193 = vcmp.lt.f32.partialorder %v742, 1.0
  %vm1194 = vcmp.lt.f32.partialorder %v743, 1.0
  %vm1195 = vcmp.lt.f32.partialorder %v744, 1.0
  %vm1196 = vcmp.lt.f32.partialorder %v745, 1.0
  %vm1197 = vcmp.lt.f32.partialorder %v746, 1.0
  %vm1198 = vcmp.lt.f32.partialorder %v747, 1.0
  %vm1199 = vcmp.lt.f32.partialorder %v748, 1.0
  %vm1200 = vcmp.lt.f32.partialorder %v749, 1.0
  %vm1201 = vcmp.lt.f32.partialorder %v750, 1.0
  %vm1202 = vcmp.lt.f32.partialorder %v751, 1.0
  %vm1203 = vcmp.lt.f32.partialorder %v752, 1.0
  %vm1204 = vcmp.lt.f32.partialorder %v753, 1.0
  %vm1205 = vcmp.lt.f32.partialorder %v754, 1.0
  %vm1206 = vcmp.lt.f32.partialorder %v755, 1.0
  %vm1207 = vcmp.lt.f32.partialorder %v756, 1.0
  %vm1208 = vcmp.lt.f32.partialorder %v757, 1.0
  %vm1209 = vcmp.lt.f32.partialorder %v758, 1.0
  %vm1210 = vcmp.lt.f32.partialorder %v759, 1.0
  %vm1211 = vcmp.lt.f32.partialorder %v760, 1.0
  %vm1212 = vcmp.lt.f32.partialorder %v761, 1.0
  %vm1213 = vcmp.lt.f32.partialorder %v762, 1.0
  %vm1214 = vcmp.lt.f32.partialorder %v763, 1.0
  %vm1215 = vcmp.lt.f32.partialorder %v764, 1.0
  %vm1216 = vcmp.lt.f32.partialorder %v765, 1.0
  %vm1217 = vcmp.lt.f32.partialorder %v766, 1.0
  %vm1218 = vcmp.lt.f32.partialorder %v767, 1.0
  %vm1219 = vcmp.lt.f32.partialorder %v768, 1.0
  %vm1220 = vcmp.lt.f32.partialorder %v769, 1.0
  %vm1221 = vcmp.lt.f32.partialorder %v770, 1.0
  %vm1222 = vcmp.lt.f32.partialorder %v771, 1.0
  %vm1223 = vcmp.lt.f32.partialorder %v772, 1.0
  %vm1224 = vcmp.lt.f32.partialorder %v773, 1.0
  %vm1225 = vcmp.lt.f32.partialorder %v774, 1.0
  %vm1226 = vcmp.lt.f32.partialorder %v775, 1.0
  %vm1227 = vcmp.lt.f32.partialorder %v776, 1.0
  %vm1228 = vmand %vm1100, %vm1164
  %vm1229 = vmand %vm1101, %vm1165
  %vm1230 = vmand %vm1102, %vm1166
  %vm1231 = vmand %vm1103, %vm1167
  %vm1232 = vmand %vm1104, %vm1168
  %vm1233 = vmand %vm1105, %vm1169
  %vm1234 = vmand %vm1106, %vm1170
  %vm1235 = vmand %vm1107, %vm1171
  %vm1236 = vmand %vm1108, %vm1172
  %vm1237 = vmand %vm1109, %vm1173
  %vm1238 = vmand %vm1110, %vm1174
  %vm1239 = vmand %vm1111, %vm1175
  %vm1240 = vmand %vm1112, %vm1176
  %vm1241 = vmand %vm1113, %vm1177
  %vm1242 = vmand %vm1114, %vm1178
  %vm1243 = vmand %vm1115, %vm1179
  %vm1244 = vmand %vm1116, %vm1180
  %vm1245 = vmand %vm1117, %vm1181
  %vm1246 = vmand %vm1118, %vm1182
  %vm1247 = vmand %vm1119, %vm1183
  %vm1248 = vmand %vm1120, %vm1184
  %vm1249 = vmand %vm1121, %vm1185
  %vm1250 = vmand %vm1122, %vm1186
  %vm1251 = vmand %vm1123, %vm1187
  %vm1252 = vmand %vm1124, %vm1188
  %vm1253 = vmand %vm1125, %vm1189
  %vm1254 = vmand %vm1126, %vm1190
  %vm1255 = vmand %vm1127, %vm1191
  %vm1256 = vmand %vm1128, %vm1192
  %vm1257 = vmand %vm1129, %vm1193
  %vm1258 = vmand %vm1130, %vm1194
  %vm1259 = vmand %vm1131, %vm1195
  %vm1260 = vmand %vm1132, %vm1196
  %vm1261 = vmand %vm1133, %vm1197
  %vm1262 = vmand %vm1134, %vm1198
  %vm1263 = vmand %vm1135, %vm1199
  %vm1264 = vmand %vm1136, %vm1200
  %vm1265 = vmand %vm1137, %vm1201
  %vm1266 = vmand %vm1138, %vm1202
  %vm1267 = vmand %vm1139, %vm1203
  %vm1268 = vmand %vm1140, %vm1204
  %vm1269 = vmand %vm1141, %vm1205
  %vm1270 = vmand %vm1142, %vm1206
  %vm1271 = vmand %vm1143, %vm1207
  %vm1272 = vmand %vm1144, %vm1208
  %vm1273 = vmand %vm1145, %vm1209
  %vm1274 = vmand %vm1146, %vm1210
  %vm1275 = vmand %vm1147, %vm1211
  %vm1276 = vmand %vm1148, %vm1212
  %vm1277 = vmand %vm1149, %vm1213
  %vm1278 = vmand %vm1150, %vm1214
  %vm1279 = vmand %vm1151, %vm1215
  %vm1280 = vmand %vm1152, %vm1216
  %vm1281 = vmand %vm1153, %vm1217
  %vm1282 = vmand %vm1154, %vm1218
  %vm1283 = vmand %vm1155, %vm1219
  %vm1284 = vmand %vm1156, %vm1220
  %vm1285 = vmand %vm1157, %vm1221
  %vm1286 = vmand %vm1158, %vm1222
  %vm1287 = vmand %vm1159, %vm1223
  %vm1288 = vmand %vm1160, %vm1224
  %vm1289 = vmand %vm1161, %vm1225
  %vm1290 = vmand %vm1162, %vm1226
  %vm1291 = vmand %vm1163, %vm1227
  %v1292 = vrsqrt.pop %v713
  %v1293 = vmul.f32 %v713, %v1292
  %vm1294 = vcmp.eq.f32.partialorder %v713, inf
  %v1295 = vsel %vm1294, %v713, %v1293
  %vm1296 = vcmp.eq.f32.partialorder %v713, 0.0
  %v1297 = vand.u32 %v713, 2147483648
  %v1298 = vsel %vm1296, %v1297, %v1295
  %v1299 = vrsqrt.pop %v714
  %v1300 = vmul.f32 %v714, %v1299
  %vm1301 = vcmp.eq.f32.partialorder %v714, inf
  %v1302 = vsel %vm1301, %v714, %v1300
  %vm1303 = vcmp.eq.f32.partialorder %v714, 0.0
  %v1304 = vand.u32 %v714, 2147483648
  %v1305 = vsel %vm1303, %v1304, %v1302
  %v1306 = vrsqrt.pop %v715
  %v1307 = vmul.f32 %v715, %v1306
  %vm1308 = vcmp.eq.f32.partialorder %v715, inf
  %v1309 = vsel %vm1308, %v715, %v1307
  %vm1310 = vcmp.eq.f32.partialorder %v715, 0.0
  %v1311 = vand.u32 %v715, 2147483648
  %v1312 = vsel %vm1310, %v1311, %v1309
  %v1313 = vrsqrt.pop %v716
  %v1314 = vmul.f32 %v716, %v1313
  %vm1315 = vcmp.eq.f32.partialorder %v716, inf
  %v1316 = vsel %vm1315, %v716, %v1314
  %vm1317 = vcmp.eq.f32.partialorder %v716, 0.0
  %v1318 = vand.u32 %v716, 2147483648
  %v1319 = vsel %vm1317, %v1318, %v1316
  %v1320 = vrsqrt.pop %v717
  %v1321 = vmul.f32 %v717, %v1320
  %vm1322 = vcmp.eq.f32.partialorder %v717, inf
  %v1323 = vsel %vm1322, %v717, %v1321
  %vm1324 = vcmp.eq.f32.partialorder %v717, 0.0
  %v1325 = vand.u32 %v717, 2147483648
  %v1326 = vsel %vm1324, %v1325, %v1323
  %v1327 = vrsqrt.pop %v718
  %v1328 = vmul.f32 %v718, %v1327
  %vm1329 = vcmp.eq.f32.partialorder %v718, inf
  %v1330 = vsel %vm1329, %v718, %v1328
  %vm1331 = vcmp.eq.f32.partialorder %v718, 0.0
  %v1332 = vand.u32 %v718, 2147483648
  %v1333 = vsel %vm1331, %v1332, %v1330
  %v1334 = vrsqrt.pop %v719
  %v1335 = vmul.f32 %v719, %v1334
  %vm1336 = vcmp.eq.f32.partialorder %v719, inf
  %v1337 = vsel %vm1336, %v719, %v1335
  %vm1338 = vcmp.eq.f32.partialorder %v719, 0.0
  %v1339 = vand.u32 %v719, 2147483648
  %v1340 = vsel %vm1338, %v1339, %v1337
  %v1341 = vrsqrt.pop %v720
  %v1342 = vmul.f32 %v720, %v1341
  %vm1343 = vcmp.eq.f32.partialorder %v720, inf
  %v1344 = vsel %vm1343, %v720, %v1342
  %vm1345 = vcmp.eq.f32.partialorder %v720, 0.0
  %v1346 = vand.u32 %v720, 2147483648
  %v1347 = vsel %vm1345, %v1346, %v1344
  %v1348 = vrsqrt.pop %v721
  %v1349 = vmul.f32 %v721, %v1348
  %vm1350 = vcmp.eq.f32.partialorder %v721, inf
  %v1351 = vsel %vm1350, %v721, %v1349
  %vm1352 = vcmp.eq.f32.partialorder %v721, 0.0
  %v1353 = vand.u32 %v721, 2147483648
  %v1354 = vsel %vm1352, %v1353, %v1351
  %v1355 = vrsqrt.pop %v722
  %v1356 = vmul.f32 %v722, %v1355
  %vm1357 = vcmp.eq.f32.partialorder %v722, inf
  %v1358 = vsel %vm1357, %v722, %v1356
  %vm1359 = vcmp.eq.f32.partialorder %v722, 0.0
  %v1360 = vand.u32 %v722, 2147483648
  %v1361 = vsel %vm1359, %v1360, %v1358
  %v1362 = vrsqrt.pop %v723
  %v1363 = vmul.f32 %v723, %v1362
  %vm1364 = vcmp.eq.f32.partialorder %v723, inf
  %v1365 = vsel %vm1364, %v723, %v1363
  %vm1366 = vcmp.eq.f32.partialorder %v723, 0.0
  %v1367 = vand.u32 %v723, 2147483648
  %v1368 = vsel %vm1366, %v1367, %v1365
  %v1369 = vrsqrt.pop %v724
  %v1370 = vmul.f32 %v724, %v1369
  %vm1371 = vcmp.eq.f32.partialorder %v724, inf
  %v1372 = vsel %vm1371, %v724, %v1370
  %vm1373 = vcmp.eq.f32.partialorder %v724, 0.0
  %v1374 = vand.u32 %v724, 2147483648
  %v1375 = vsel %vm1373, %v1374, %v1372
  %v1376 = vrsqrt.pop %v725
  %v1377 = vmul.f32 %v725, %v1376
  %vm1378 = vcmp.eq.f32.partialorder %v725, inf
  %v1379 = vsel %vm1378, %v725, %v1377
  %vm1380 = vcmp.eq.f32.partialorder %v725, 0.0
  %v1381 = vand.u32 %v725, 2147483648
  %v1382 = vsel %vm1380, %v1381, %v1379
  %v1383 = vrsqrt.pop %v726
  %v1384 = vmul.f32 %v726, %v1383
  %vm1385 = vcmp.eq.f32.partialorder %v726, inf
  %v1386 = vsel %vm1385, %v726, %v1384
  %vm1387 = vcmp.eq.f32.partialorder %v726, 0.0
  %v1388 = vand.u32 %v726, 2147483648
  %v1389 = vsel %vm1387, %v1388, %v1386
  %v1390 = vrsqrt.pop %v727
  %v1391 = vmul.f32 %v727, %v1390
  %vm1392 = vcmp.eq.f32.partialorder %v727, inf
  %v1393 = vsel %vm1392, %v727, %v1391
  %vm1394 = vcmp.eq.f32.partialorder %v727, 0.0
  %v1395 = vand.u32 %v727, 2147483648
  %v1396 = vsel %vm1394, %v1395, %v1393
  %v1397 = vrsqrt.pop %v728
  %v1398 = vmul.f32 %v728, %v1397
  %vm1399 = vcmp.eq.f32.partialorder %v728, inf
  %v1400 = vsel %vm1399, %v728, %v1398
  %vm1401 = vcmp.eq.f32.partialorder %v728, 0.0
  %v1402 = vand.u32 %v728, 2147483648
  %v1403 = vsel %vm1401, %v1402, %v1400
  %v1404 = vrsqrt.pop %v729
  %v1405 = vmul.f32 %v729, %v1404
  %vm1406 = vcmp.eq.f32.partialorder %v729, inf
  %v1407 = vsel %vm1406, %v729, %v1405
  %vm1408 = vcmp.eq.f32.partialorder %v729, 0.0
  %v1409 = vand.u32 %v729, 2147483648
  %v1410 = vsel %vm1408, %v1409, %v1407
  %v1411 = vrsqrt.pop %v730
  %v1412 = vmul.f32 %v730, %v1411
  %vm1413 = vcmp.eq.f32.partialorder %v730, inf
  %v1414 = vsel %vm1413, %v730, %v1412
  %vm1415 = vcmp.eq.f32.partialorder %v730, 0.0
  %v1416 = vand.u32 %v730, 2147483648
  %v1417 = vsel %vm1415, %v1416, %v1414
  %v1418 = vrsqrt.pop %v731
  %v1419 = vmul.f32 %v731, %v1418
  %vm1420 = vcmp.eq.f32.partialorder %v731, inf
  %v1421 = vsel %vm1420, %v731, %v1419
  %vm1422 = vcmp.eq.f32.partialorder %v731, 0.0
  %v1423 = vand.u32 %v731, 2147483648
  %v1424 = vsel %vm1422, %v1423, %v1421
  %v1425 = vrsqrt.pop %v732
  %v1426 = vmul.f32 %v732, %v1425
  %vm1427 = vcmp.eq.f32.partialorder %v732, inf
  %v1428 = vsel %vm1427, %v732, %v1426
  %vm1429 = vcmp.eq.f32.partialorder %v732, 0.0
  %v1430 = vand.u32 %v732, 2147483648
  %v1431 = vsel %vm1429, %v1430, %v1428
  %v1432 = vrsqrt.pop %v733
  %v1433 = vmul.f32 %v733, %v1432
  %vm1434 = vcmp.eq.f32.partialorder %v733, inf
  %v1435 = vsel %vm1434, %v733, %v1433
  %vm1436 = vcmp.eq.f32.partialorder %v733, 0.0
  %v1437 = vand.u32 %v733, 2147483648
  %v1438 = vsel %vm1436, %v1437, %v1435
  %v1439 = vrsqrt.pop %v734
  %v1440 = vmul.f32 %v734, %v1439
  %vm1441 = vcmp.eq.f32.partialorder %v734, inf
  %v1442 = vsel %vm1441, %v734, %v1440
  %vm1443 = vcmp.eq.f32.partialorder %v734, 0.0
  %v1444 = vand.u32 %v734, 2147483648
  %v1445 = vsel %vm1443, %v1444, %v1442
  %v1446 = vrsqrt.pop %v735
  %v1447 = vmul.f32 %v735, %v1446
  %vm1448 = vcmp.eq.f32.partialorder %v735, inf
  %v1449 = vsel %vm1448, %v735, %v1447
  %vm1450 = vcmp.eq.f32.partialorder %v735, 0.0
  %v1451 = vand.u32 %v735, 2147483648
  %v1452 = vsel %vm1450, %v1451, %v1449
  %v1453 = vrsqrt.pop %v736
  %v1454 = vmul.f32 %v736, %v1453
  %vm1455 = vcmp.eq.f32.partialorder %v736, inf
  %v1456 = vsel %vm1455, %v736, %v1454
  %vm1457 = vcmp.eq.f32.partialorder %v736, 0.0
  %v1458 = vand.u32 %v736, 2147483648
  %v1459 = vsel %vm1457, %v1458, %v1456
  %v1460 = vrsqrt.pop %v737
  %v1461 = vmul.f32 %v737, %v1460
  %vm1462 = vcmp.eq.f32.partialorder %v737, inf
  %v1463 = vsel %vm1462, %v737, %v1461
  %vm1464 = vcmp.eq.f32.partialorder %v737, 0.0
  %v1465 = vand.u32 %v737, 2147483648
  %v1466 = vsel %vm1464, %v1465, %v1463
  %v1467 = vrsqrt.pop %v738
  %v1468 = vmul.f32 %v738, %v1467
  %vm1469 = vcmp.eq.f32.partialorder %v738, inf
  %v1470 = vsel %vm1469, %v738, %v1468
  %vm1471 = vcmp.eq.f32.partialorder %v738, 0.0
  %v1472 = vand.u32 %v738, 2147483648
  %v1473 = vsel %vm1471, %v1472, %v1470
  %v1474 = vrsqrt.pop %v739
  %v1475 = vmul.f32 %v739, %v1474
  %vm1476 = vcmp.eq.f32.partialorder %v739, inf
  %v1477 = vsel %vm1476, %v739, %v1475
  %vm1478 = vcmp.eq.f32.partialorder %v739, 0.0
  %v1479 = vand.u32 %v739, 2147483648
  %v1480 = vsel %vm1478, %v1479, %v1477
  %v1481 = vrsqrt.pop %v740
  %v1482 = vmul.f32 %v740, %v1481
  %vm1483 = vcmp.eq.f32.partialorder %v740, inf
  %v1484 = vsel %vm1483, %v740, %v1482
  %vm1485 = vcmp.eq.f32.partialorder %v740, 0.0
  %v1486 = vand.u32 %v740, 2147483648
  %v1487 = vsel %vm1485, %v1486, %v1484
  %v1488 = vrsqrt.pop %v741
  %v1489 = vmul.f32 %v741, %v1488
  %vm1490 = vcmp.eq.f32.partialorder %v741, inf
  %v1491 = vsel %vm1490, %v741, %v1489
  %vm1492 = vcmp.eq.f32.partialorder %v741, 0.0
  %v1493 = vand.u32 %v741, 2147483648
  %v1494 = vsel %vm1492, %v1493, %v1491
  %v1495 = vrsqrt.pop %v742
  %v1496 = vmul.f32 %v742, %v1495
  %vm1497 = vcmp.eq.f32.partialorder %v742, inf
  %v1498 = vsel %vm1497, %v742, %v1496
  %vm1499 = vcmp.eq.f32.partialorder %v742, 0.0
  %v1500 = vand.u32 %v742, 2147483648
  %v1501 = vsel %vm1499, %v1500, %v1498
  %v1502 = vrsqrt.pop %v743
  %v1503 = vmul.f32 %v743, %v1502
  %vm1504 = vcmp.eq.f32.partialorder %v743, inf
  %v1505 = vsel %vm1504, %v743, %v1503
  %vm1506 = vcmp.eq.f32.partialorder %v743, 0.0
  %v1507 = vand.u32 %v743, 2147483648
  %v1508 = vsel %vm1506, %v1507, %v1505
  %v1509 = vrsqrt.pop %v744
  %v1510 = vmul.f32 %v744, %v1509
  %vm1511 = vcmp.eq.f32.partialorder %v744, inf
  %v1512 = vsel %vm1511, %v744, %v1510
  %vm1513 = vcmp.eq.f32.partialorder %v744, 0.0
  %v1514 = vand.u32 %v744, 2147483648
  %v1515 = vsel %vm1513, %v1514, %v1512
  %v1516 = vrsqrt.pop %v745
  %v1517 = vmul.f32 %v745, %v1516
  %vm1518 = vcmp.eq.f32.partialorder %v745, inf
  %v1519 = vsel %vm1518, %v745, %v1517
  %vm1520 = vcmp.eq.f32.partialorder %v745, 0.0
  %v1521 = vand.u32 %v745, 2147483648
  %v1522 = vsel %vm1520, %v1521, %v1519
  %v1523 = vrsqrt.pop %v746
  %v1524 = vmul.f32 %v746, %v1523
  %vm1525 = vcmp.eq.f32.partialorder %v746, inf
  %v1526 = vsel %vm1525, %v746, %v1524
  %vm1527 = vcmp.eq.f32.partialorder %v746, 0.0
  %v1528 = vand.u32 %v746, 2147483648
  %v1529 = vsel %vm1527, %v1528, %v1526
  %v1530 = vrsqrt.pop %v747
  %v1531 = vmul.f32 %v747, %v1530
  %vm1532 = vcmp.eq.f32.partialorder %v747, inf
  %v1533 = vsel %vm1532, %v747, %v1531
  %vm1534 = vcmp.eq.f32.partialorder %v747, 0.0
  %v1535 = vand.u32 %v747, 2147483648
  %v1536 = vsel %vm1534, %v1535, %v1533
  %v1537 = vrsqrt.pop %v748
  %v1538 = vmul.f32 %v748, %v1537
  %vm1539 = vcmp.eq.f32.partialorder %v748, inf
  %v1540 = vsel %vm1539, %v748, %v1538
  %vm1541 = vcmp.eq.f32.partialorder %v748, 0.0
  %v1542 = vand.u32 %v748, 2147483648
  %v1543 = vsel %vm1541, %v1542, %v1540
  %v1544 = vrsqrt.pop %v749
  %v1545 = vmul.f32 %v749, %v1544
  %vm1546 = vcmp.eq.f32.partialorder %v749, inf
  %v1547 = vsel %vm1546, %v749, %v1545
  %vm1548 = vcmp.eq.f32.partialorder %v749, 0.0
  %v1549 = vand.u32 %v749, 2147483648
  %v1550 = vsel %vm1548, %v1549, %v1547
  %v1551 = vrsqrt.pop %v750
  %v1552 = vmul.f32 %v750, %v1551
  %vm1553 = vcmp.eq.f32.partialorder %v750, inf
  %v1554 = vsel %vm1553, %v750, %v1552
  %vm1555 = vcmp.eq.f32.partialorder %v750, 0.0
  %v1556 = vand.u32 %v750, 2147483648
  %v1557 = vsel %vm1555, %v1556, %v1554
  %v1558 = vrsqrt.pop %v751
  %v1559 = vmul.f32 %v751, %v1558
  %vm1560 = vcmp.eq.f32.partialorder %v751, inf
  %v1561 = vsel %vm1560, %v751, %v1559
  %vm1562 = vcmp.eq.f32.partialorder %v751, 0.0
  %v1563 = vand.u32 %v751, 2147483648
  %v1564 = vsel %vm1562, %v1563, %v1561
  %v1565 = vrsqrt.pop %v752
  %v1566 = vmul.f32 %v752, %v1565
  %vm1567 = vcmp.eq.f32.partialorder %v752, inf
  %v1568 = vsel %vm1567, %v752, %v1566
  %vm1569 = vcmp.eq.f32.partialorder %v752, 0.0
  %v1570 = vand.u32 %v752, 2147483648
  %v1571 = vsel %vm1569, %v1570, %v1568
  %v1572 = vrsqrt.pop %v753
  %v1573 = vmul.f32 %v753, %v1572
  %vm1574 = vcmp.eq.f32.partialorder %v753, inf
  %v1575 = vsel %vm1574, %v753, %v1573
  %vm1576 = vcmp.eq.f32.partialorder %v753, 0.0
  %v1577 = vand.u32 %v753, 2147483648
  %v1578 = vsel %vm1576, %v1577, %v1575
  %v1579 = vrsqrt.pop %v754
  %v1580 = vmul.f32 %v754, %v1579
  %vm1581 = vcmp.eq.f32.partialorder %v754, inf
  %v1582 = vsel %vm1581, %v754, %v1580
  %vm1583 = vcmp.eq.f32.partialorder %v754, 0.0
  %v1584 = vand.u32 %v754, 2147483648
  %v1585 = vsel %vm1583, %v1584, %v1582
  %v1586 = vrsqrt.pop %v755
  %v1587 = vmul.f32 %v755, %v1586
  %vm1588 = vcmp.eq.f32.partialorder %v755, inf
  %v1589 = vsel %vm1588, %v755, %v1587
  %vm1590 = vcmp.eq.f32.partialorder %v755, 0.0
  %v1591 = vand.u32 %v755, 2147483648
  %v1592 = vsel %vm1590, %v1591, %v1589
  %v1593 = vrsqrt.pop %v756
  %v1594 = vmul.f32 %v756, %v1593
  %vm1595 = vcmp.eq.f32.partialorder %v756, inf
  %v1596 = vsel %vm1595, %v756, %v1594
  %vm1597 = vcmp.eq.f32.partialorder %v756, 0.0
  %v1598 = vand.u32 %v756, 2147483648
  %v1599 = vsel %vm1597, %v1598, %v1596
  %v1600 = vrsqrt.pop %v757
  %v1601 = vmul.f32 %v757, %v1600
  %vm1602 = vcmp.eq.f32.partialorder %v757, inf
  %v1603 = vsel %vm1602, %v757, %v1601
  %vm1604 = vcmp.eq.f32.partialorder %v757, 0.0
  %v1605 = vand.u32 %v757, 2147483648
  %v1606 = vsel %vm1604, %v1605, %v1603
  %v1607 = vrsqrt.pop %v758
  %v1608 = vmul.f32 %v758, %v1607
  %vm1609 = vcmp.eq.f32.partialorder %v758, inf
  %v1610 = vsel %vm1609, %v758, %v1608
  %vm1611 = vcmp.eq.f32.partialorder %v758, 0.0
  %v1612 = vand.u32 %v758, 2147483648
  %v1613 = vsel %vm1611, %v1612, %v1610
  %v1614 = vrsqrt.pop %v759
  %v1615 = vmul.f32 %v759, %v1614
  %vm1616 = vcmp.eq.f32.partialorder %v759, inf
  %v1617 = vsel %vm1616, %v759, %v1615
  %vm1618 = vcmp.eq.f32.partialorder %v759, 0.0
  %v1619 = vand.u32 %v759, 2147483648
  %v1620 = vsel %vm1618, %v1619, %v1617
  %v1621 = vrsqrt.pop %v760
  %v1622 = vmul.f32 %v760, %v1621
  %vm1623 = vcmp.eq.f32.partialorder %v760, inf
  %v1624 = vsel %vm1623, %v760, %v1622
  %vm1625 = vcmp.eq.f32.partialorder %v760, 0.0
  %v1626 = vand.u32 %v760, 2147483648
  %v1627 = vsel %vm1625, %v1626, %v1624
  %v1628 = vrsqrt.pop %v761
  %v1629 = vmul.f32 %v761, %v1628
  %vm1630 = vcmp.eq.f32.partialorder %v761, inf
  %v1631 = vsel %vm1630, %v761, %v1629
  %vm1632 = vcmp.eq.f32.partialorder %v761, 0.0
  %v1633 = vand.u32 %v761, 2147483648
  %v1634 = vsel %vm1632, %v1633, %v1631
  %v1635 = vrsqrt.pop %v762
  %v1636 = vmul.f32 %v762, %v1635
  %vm1637 = vcmp.eq.f32.partialorder %v762, inf
  %v1638 = vsel %vm1637, %v762, %v1636
  %vm1639 = vcmp.eq.f32.partialorder %v762, 0.0
  %v1640 = vand.u32 %v762, 2147483648
  %v1641 = vsel %vm1639, %v1640, %v1638
  %v1642 = vrsqrt.pop %v763
  %v1643 = vmul.f32 %v763, %v1642
  %vm1644 = vcmp.eq.f32.partialorder %v763, inf
  %v1645 = vsel %vm1644, %v763, %v1643
  %vm1646 = vcmp.eq.f32.partialorder %v763, 0.0
  %v1647 = vand.u32 %v763, 2147483648
  %v1648 = vsel %vm1646, %v1647, %v1645
  %v1649 = vrsqrt.pop %v764
  %v1650 = vmul.f32 %v764, %v1649
  %vm1651 = vcmp.eq.f32.partialorder %v764, inf
  %v1652 = vsel %vm1651, %v764, %v1650
  %vm1653 = vcmp.eq.f32.partialorder %v764, 0.0
  %v1654 = vand.u32 %v764, 2147483648
  %v1655 = vsel %vm1653, %v1654, %v1652
  %v1656 = vrsqrt.pop %v765
  %v1657 = vmul.f32 %v765, %v1656
  %vm1658 = vcmp.eq.f32.partialorder %v765, inf
  %v1659 = vsel %vm1658, %v765, %v1657
  %vm1660 = vcmp.eq.f32.partialorder %v765, 0.0
  %v1661 = vand.u32 %v765, 2147483648
  %v1662 = vsel %vm1660, %v1661, %v1659
  %v1663 = vrsqrt.pop %v766
  %v1664 = vmul.f32 %v766, %v1663
  %vm1665 = vcmp.eq.f32.partialorder %v766, inf
  %v1666 = vsel %vm1665, %v766, %v1664
  %vm1667 = vcmp.eq.f32.partialorder %v766, 0.0
  %v1668 = vand.u32 %v766, 2147483648
  %v1669 = vsel %vm1667, %v1668, %v1666
  %v1670 = vrsqrt.pop %v767
  %v1671 = vmul.f32 %v767, %v1670
  %vm1672 = vcmp.eq.f32.partialorder %v767, inf
  %v1673 = vsel %vm1672, %v767, %v1671
  %vm1674 = vcmp.eq.f32.partialorder %v767, 0.0
  %v1675 = vand.u32 %v767, 2147483648
  %v1676 = vsel %vm1674, %v1675, %v1673
  %v1677 = vrsqrt.pop %v768
  %v1678 = vmul.f32 %v768, %v1677
  %vm1679 = vcmp.eq.f32.partialorder %v768, inf
  %v1680 = vsel %vm1679, %v768, %v1678
  %vm1681 = vcmp.eq.f32.partialorder %v768, 0.0
  %v1682 = vand.u32 %v768, 2147483648
  %v1683 = vsel %vm1681, %v1682, %v1680
  %v1684 = vrsqrt.pop %v769
  %v1685 = vmul.f32 %v769, %v1684
  %vm1686 = vcmp.eq.f32.partialorder %v769, inf
  %v1687 = vsel %vm1686, %v769, %v1685
  %vm1688 = vcmp.eq.f32.partialorder %v769, 0.0
  %v1689 = vand.u32 %v769, 2147483648
  %v1690 = vsel %vm1688, %v1689, %v1687
  %v1691 = vrsqrt.pop %v770
  %v1692 = vmul.f32 %v770, %v1691
  %vm1693 = vcmp.eq.f32.partialorder %v770, inf
  %v1694 = vsel %vm1693, %v770, %v1692
  %vm1695 = vcmp.eq.f32.partialorder %v770, 0.0
  %v1696 = vand.u32 %v770, 2147483648
  %v1697 = vsel %vm1695, %v1696, %v1694
  %v1698 = vrsqrt.pop %v771
  %v1699 = vmul.f32 %v771, %v1698
  %vm1700 = vcmp.eq.f32.partialorder %v771, inf
  %v1701 = vsel %vm1700, %v771, %v1699
  %vm1702 = vcmp.eq.f32.partialorder %v771, 0.0
  %v1703 = vand.u32 %v771, 2147483648
  %v1704 = vsel %vm1702, %v1703, %v1701
  %v1705 = vrsqrt.pop %v772
  %v1706 = vmul.f32 %v772, %v1705
  %vm1707 = vcmp.eq.f32.partialorder %v772, inf
  %v1708 = vsel %vm1707, %v772, %v1706
  %vm1709 = vcmp.eq.f32.partialorder %v772, 0.0
  %v1710 = vand.u32 %v772, 2147483648
  %v1711 = vsel %vm1709, %v1710, %v1708
  %v1712 = vrsqrt.pop %v773
  %v1713 = vmul.f32 %v773, %v1712
  %vm1714 = vcmp.eq.f32.partialorder %v773, inf
  %v1715 = vsel %vm1714, %v773, %v1713
  %vm1716 = vcmp.eq.f32.partialorder %v773, 0.0
  %v1717 = vand.u32 %v773, 2147483648
  %v1718 = vsel %vm1716, %v1717, %v1715
  %v1719 = vrsqrt.pop %v774
  %v1720 = vmul.f32 %v774, %v1719
  %vm1721 = vcmp.eq.f32.partialorder %v774, inf
  %v1722 = vsel %vm1721, %v774, %v1720
  %vm1723 = vcmp.eq.f32.partialorder %v774, 0.0
  %v1724 = vand.u32 %v774, 2147483648
  %v1725 = vsel %vm1723, %v1724, %v1722
  %v1726 = vrsqrt.pop %v775
  %v1727 = vmul.f32 %v775, %v1726
  %vm1728 = vcmp.eq.f32.partialorder %v775, inf
  %v1729 = vsel %vm1728, %v775, %v1727
  %vm1730 = vcmp.eq.f32.partialorder %v775, 0.0
  %v1731 = vand.u32 %v775, 2147483648
  %v1732 = vsel %vm1730, %v1731, %v1729
  %v1733 = vrsqrt.pop %v776
  %v1734 = vmul.f32 %v776, %v1733
  %vm1735 = vcmp.eq.f32.partialorder %v776, inf
  %v1736 = vsel %vm1735, %v776, %v1734
  %vm1737 = vcmp.eq.f32.partialorder %v776, 0.0
  %v1738 = vand.u32 %v776, 2147483648
  %v1739 = vsel %vm1737, %v1738, %v1736
  %v1740 = vsel %vm1036, %v713, 0.0
  %v1741 = vsel %vm1037, %v714, 0.0
  %v1742 = vsel %vm1038, %v715, 0.0
  %v1743 = vsel %vm1039, %v716, 0.0
  %v1744 = vsel %vm1040, %v717, 0.0
  %v1745 = vsel %vm1041, %v718, 0.0
  %v1746 = vsel %vm1042, %v719, 0.0
  %v1747 = vsel %vm1043, %v720, 0.0
  %v1748 = vsel %vm1044, %v721, 0.0
  %v1749 = vsel %vm1045, %v722, 0.0
  %v1750 = vsel %vm1046, %v723, 0.0
  %v1751 = vsel %vm1047, %v724, 0.0
  %v1752 = vsel %vm1048, %v725, 0.0
  %v1753 = vsel %vm1049, %v726, 0.0
  %v1754 = vsel %vm1050, %v727, 0.0
  %v1755 = vsel %vm1051, %v728, 0.0
  %v1756 = vsel %vm1052, %v729, 0.0
  %v1757 = vsel %vm1053, %v730, 0.0
  %v1758 = vsel %vm1054, %v731, 0.0
  %v1759 = vsel %vm1055, %v732, 0.0
  %v1760 = vsel %vm1056, %v733, 0.0
  %v1761 = vsel %vm1057, %v734, 0.0
  %v1762 = vsel %vm1058, %v735, 0.0
  %v1763 = vsel %vm1059, %v736, 0.0
  %v1764 = vsel %vm1060, %v737, 0.0
  %v1765 = vsel %vm1061, %v738, 0.0
  %v1766 = vsel %vm1062, %v739, 0.0
  %v1767 = vsel %vm1063, %v740, 0.0
  %v1768 = vsel %vm1064, %v741, 0.0
  %v1769 = vsel %vm1065, %v742, 0.0
  %v1770 = vsel %vm1066, %v743, 0.0
  %v1771 = vsel %vm1067, %v744, 0.0
  %v1772 = vsel %vm1068, %v745, 0.0
  %v1773 = vsel %vm1069, %v746, 0.0
  %v1774 = vsel %vm1070, %v747, 0.0
  %v1775 = vsel %vm1071, %v748, 0.0
  %v1776 = vsel %vm1072, %v749, 0.0
  %v1777 = vsel %vm1073, %v750, 0.0
  %v1778 = vsel %vm1074, %v751, 0.0
  %v1779 = vsel %vm1075, %v752, 0.0
  %v1780 = vsel %vm1076, %v753, 0.0
  %v1781 = vsel %vm1077, %v754, 0.0
  %v1782 = vsel %vm1078, %v755, 0.0
  %v1783 = vsel %vm1079, %v756, 0.0
  %v1784 = vsel %vm1080, %v757, 0.0
  %v1785 = vsel %vm1081, %v758, 0.0
  %v1786 = vsel %vm1082, %v759, 0.0
  %v1787 = vsel %vm1083, %v760, 0.0
  %v1788 = vsel %vm1084, %v761, 0.0
  %v1789 = vsel %vm1085, %v762, 0.0
  %v1790 = vsel %vm1086, %v763, 0.0
  %v1791 = vsel %vm1087, %v764, 0.0
  %v1792 = vsel %vm1088, %v765, 0.0
  %v1793 = vsel %vm1089, %v766, 0.0
  %v1794 = vsel %vm1090, %v767, 0.0
  %v1795 = vsel %vm1091, %v768, 0.0
  %v1796 = vsel %vm1092, %v769, 0.0
  %v1797 = vsel %vm1093, %v770, 0.0
  %v1798 = vsel %vm1094, %v771, 0.0
  %v1799 = vsel %vm1095, %v772, 0.0
  %v1800 = vsel %vm1096, %v773, 0.0
  %v1801 = vsel %vm1097, %v774, 0.0
  %v1802 = vsel %vm1098, %v775, 0.0
  %v1803 = vsel %vm1099, %v776, 0.0
  %v1804 = vsub.f32 1.0, %v1298
  %v1805 = vsub.f32 1.0, %v1305
  %v1806 = vsub.f32 1.0, %v1312
  %v1807 = vsub.f32 1.0, %v1319
  %v1808 = vsub.f32 1.0, %v1326
  %v1809 = vsub.f32 1.0, %v1333
  %v1810 = vsub.f32 1.0, %v1340
  %v1811 = vsub.f32 1.0, %v1347
  %v1812 = vsub.f32 1.0, %v1354
  %v1813 = vsub.f32 1.0, %v1361
  %v1814 = vsub.f32 1.0, %v1368
  %v1815 = vsub.f32 1.0, %v1375
  %v1816 = vsub.f32 1.0, %v1382
  %v1817 = vsub.f32 1.0, %v1389
  %v1818 = vsub.f32 1.0, %v1396
  %v1819 = vsub.f32 1.0, %v1403
  %v1820 = vsub.f32 1.0, %v1410
  %v1821 = vsub.f32 1.0, %v1417
  %v1822 = vsub.f32 1.0, %v1424
  %v1823 = vsub.f32 1.0, %v1431
  %v1824 = vsub.f32 1.0, %v1438
  %v1825 = vsub.f32 1.0, %v1445
  %v1826 = vsub.f32 1.0, %v1452
  %v1827 = vsub.f32 1.0, %v1459
  %v1828 = vsub.f32 1.0, %v1466
  %v1829 = vsub.f32 1.0, %v1473
  %v1830 = vsub.f32 1.0, %v1480
  %v1831 = vsub.f32 1.0, %v1487
  %v1832 = vsub.f32 1.0, %v1494
  %v1833 = vsub.f32 1.0, %v1501
  %v1834 = vsub.f32 1.0, %v1508
  %v1835 = vsub.f32 1.0, %v1515
  %v1836 = vsub.f32 1.0, %v1522
  %v1837 = vsub.f32 1.0, %v1529
  %v1838 = vsub.f32 1.0, %v1536
  %v1839 = vsub.f32 1.0, %v1543
  %v1840 = vsub.f32 1.0, %v1550
  %v1841 = vsub.f32 1.0, %v1557
  %v1842 = vsub.f32 1.0, %v1564
  %v1843 = vsub.f32 1.0, %v1571
  %v1844 = vsub.f32 1.0, %v1578
  %v1845 = vsub.f32 1.0, %v1585
  %v1846 = vsub.f32 1.0, %v1592
  %v1847 = vsub.f32 1.0, %v1599
  %v1848 = vsub.f32 1.0, %v1606
  %v1849 = vsub.f32 1.0, %v1613
  %v1850 = vsub.f32 1.0, %v1620
  %v1851 = vsub.f32 1.0, %v1627
  %v1852 = vsub.f32 1.0, %v1634
  %v1853 = vsub.f32 1.0, %v1641
  %v1854 = vsub.f32 1.0, %v1648
  %v1855 = vsub.f32 1.0, %v1655
  %v1856 = vsub.f32 1.0, %v1662
  %v1857 = vsub.f32 1.0, %v1669
  %v1858 = vsub.f32 1.0, %v1676
  %v1859 = vsub.f32 1.0, %v1683
  %v1860 = vsub.f32 1.0, %v1690
  %v1861 = vsub.f32 1.0, %v1697
  %v1862 = vsub.f32 1.0, %v1704
  %v1863 = vsub.f32 1.0, %v1711
  %v1864 = vsub.f32 1.0, %v1718
  %v1865 = vsub.f32 1.0, %v1725
  %v1866 = vsub.f32 1.0, %v1732
  %v1867 = vsub.f32 1.0, %v1739
  %v1868 = vsel %vm1228, %v1804, 0.0
  %v1869 = vsel %vm1229, %v1805, 0.0
  %v1870 = vsel %vm1230, %v1806, 0.0
  %v1871 = vsel %vm1231, %v1807, 0.0
  %v1872 = vsel %vm1232, %v1808, 0.0
  %v1873 = vsel %vm1233, %v1809, 0.0
  %v1874 = vsel %vm1234, %v1810, 0.0
  %v1875 = vsel %vm1235, %v1811, 0.0
  %v1876 = vsel %vm1236, %v1812, 0.0
  %v1877 = vsel %vm1237, %v1813, 0.0
  %v1878 = vsel %vm1238, %v1814, 0.0
  %v1879 = vsel %vm1239, %v1815, 0.0
  %v1880 = vsel %vm1240, %v1816, 0.0
  %v1881 = vsel %vm1241, %v1817, 0.0
  %v1882 = vsel %vm1242, %v1818, 0.0
  %v1883 = vsel %vm1243, %v1819, 0.0
  %v1884 = vsel %vm1244, %v1820, 0.0
  %v1885 = vsel %vm1245, %v1821, 0.0
  %v1886 = vsel %vm1246, %v1822, 0.0
  %v1887 = vsel %vm1247, %v1823, 0.0
  %v1888 = vsel %vm1248, %v1824, 0.0
  %v1889 = vsel %vm1249, %v1825, 0.0
  %v1890 = vsel %vm1250, %v1826, 0.0
  %v1891 = vsel %vm1251, %v1827, 0.0
  %v1892 = vsel %vm1252, %v1828, 0.0
  %v1893 = vsel %vm1253, %v1829, 0.0
  %v1894 = vsel %vm1254, %v1830, 0.0
  %v1895 = vsel %vm1255, %v1831, 0.0
  %v1896 = vsel %vm1256, %v1832, 0.0
  %v1897 = vsel %vm1257, %v1833, 0.0
  %v1898 = vsel %vm1258, %v1834, 0.0
  %v1899 = vsel %vm1259, %v1835, 0.0
  %v1900 = vsel %vm1260, %v1836, 0.0
  %v1901 = vsel %vm1261, %v1837, 0.0
  %v1902 = vsel %vm1262, %v1838, 0.0
  %v1903 = vsel %vm1263, %v1839, 0.0
  %v1904 = vsel %vm1264, %v1840, 0.0
  %v1905 = vsel %vm1265, %v1841, 0.0
  %v1906 = vsel %vm1266, %v1842, 0.0
  %v1907 = vsel %vm1267, %v1843, 0.0
  %v1908 = vsel %vm1268, %v1844, 0.0
  %v1909 = vsel %vm1269, %v1845, 0.0
  %v1910 = vsel %vm1270, %v1846, 0.0
  %v1911 = vsel %vm1271, %v1847, 0.0
  %v1912 = vsel %vm1272, %v1848, 0.0
  %v1913 = vsel %vm1273, %v1849, 0.0
  %v1914 = vsel %vm1274, %v1850, 0.0
  %v1915 = vsel %vm1275, %v1851, 0.0
  %v1916 = vsel %vm1276, %v1852, 0.0
  %v1917 = vsel %vm1277, %v1853, 0.0
  %v1918 = vsel %vm1278, %v1854, 0.0
  %v1919 = vsel %vm1279, %v1855, 0.0
  %v1920 = vsel %vm1280, %v1856, 0.0
  %v1921 = vsel %vm1281, %v1857, 0.0
  %v1922 = vsel %vm1282, %v1858, 0.0
  %v1923 = vsel %vm1283, %v1859, 0.0
  %v1924 = vsel %vm1284, %v1860, 0.0
  %v1925 = vsel %vm1285, %v1861, 0.0
  %v1926 = vsel %vm1286, %v1862, 0.0
  %v1927 = vsel %vm1287, %v1863, 0.0
  %v1928 = vsel %vm1288, %v1864, 0.0
  %v1929 = vsel %vm1289, %v1865, 0.0
  %v1930 = vsel %vm1290, %v1866, 0.0
  %v1931 = vsel %vm1291, %v1867, 0.0
  %v1932 = vsel %vm1228, 1, 0
  %v1933 = vsel %vm1229, 1, 0
  %v1934 = vsel %vm1230, 1, 0
  %v1935 = vsel %vm1231, 1, 0
  %v1936 = vsel %vm1232, 1, 0
  %v1937 = vsel %vm1233, 1, 0
  %v1938 = vsel %vm1234, 1, 0
  %v1939 = vsel %vm1235, 1, 0
  %v1940 = vsel %vm1236, 1, 0
  %v1941 = vsel %vm1237, 1, 0
  %v1942 = vsel %vm1238, 1, 0
  %v1943 = vsel %vm1239, 1, 0
  %v1944 = vsel %vm1240, 1, 0
  %v1945 = vsel %vm1241, 1, 0
  %v1946 = vsel %vm1242, 1, 0
  %v1947 = vsel %vm1243, 1, 0
  %v1948 = vsel %vm1244, 1, 0
  %v1949 = vsel %vm1245, 1, 0
  %v1950 = vsel %vm1246, 1, 0
  %v1951 = vsel %vm1247, 1, 0
  %v1952 = vsel %vm1248, 1, 0
  %v1953 = vsel %vm1249, 1, 0
  %v1954 = vsel %vm1250, 1, 0
  %v1955 = vsel %vm1251, 1, 0
  %v1956 = vsel %vm1252, 1, 0
  %v1957 = vsel %vm1253, 1, 0
  %v1958 = vsel %vm1254, 1, 0
  %v1959 = vsel %vm1255, 1, 0
  %v1960 = vsel %vm1256, 1, 0
  %v1961 = vsel %vm1257, 1, 0
  %v1962 = vsel %vm1258, 1, 0
  %v1963 = vsel %vm1259, 1, 0
  %v1964 = vsel %vm1260, 1, 0
  %v1965 = vsel %vm1261, 1, 0
  %v1966 = vsel %vm1262, 1, 0
  %v1967 = vsel %vm1263, 1, 0
  %v1968 = vsel %vm1264, 1, 0
  %v1969 = vsel %vm1265, 1, 0
  %v1970 = vsel %vm1266, 1, 0
  %v1971 = vsel %vm1267, 1, 0
  %v1972 = vsel %vm1268, 1, 0
  %v1973 = vsel %vm1269, 1, 0
  %v1974 = vsel %vm1270, 1, 0
  %v1975 = vsel %vm1271, 1, 0
  %v1976 = vsel %vm1272, 1, 0
  %v1977 = vsel %vm1273, 1, 0
  %v1978 = vsel %vm1274, 1, 0
  %v1979 = vsel %vm1275, 1, 0
  %v1980 = vsel %vm1276, 1, 0
  %v1981 = vsel %vm1277, 1, 0
  %v1982 = vsel %vm1278, 1, 0
  %v1983 = vsel %vm1279, 1, 0
  %v1984 = vsel %vm1280, 1, 0
  %v1985 = vsel %vm1281, 1, 0
  %v1986 = vsel %vm1282, 1, 0
  %v1987 = vsel %vm1283, 1, 0
  %v1988 = vsel %vm1284, 1, 0
  %v1989 = vsel %vm1285, 1, 0
  %v1990 = vsel %vm1286, 1, 0
  %v1991 = vsel %vm1287, 1, 0
  %v1992 = vsel %vm1288, 1, 0
  %v1993 = vsel %vm1289, 1, 0
  %v1994 = vsel %vm1290, 1, 0
  %v1995 = vsel %vm1291, 1, 0
  %v1996 = vcvt.s32.f32 %v1932
  %v1997 = vcvt.s32.f32 %v1933
  %v1998 = vcvt.s32.f32 %v1934
  %v1999 = vcvt.s32.f32 %v1935
  %v2000 = vcvt.s32.f32 %v1936
  %v2001 = vcvt.s32.f32 %v1937
  %v2002 = vcvt.s32.f32 %v1938
  %v2003 = vcvt.s32.f32 %v1939
  %v2004 = vcvt.s32.f32 %v1940
  %v2005 = vcvt.s32.f32 %v1941
  %v2006 = vcvt.s32.f32 %v1942
  %v2007 = vcvt.s32.f32 %v1943
  %v2008 = vcvt.s32.f32 %v1944
  %v2009 = vcvt.s32.f32 %v1945
  %v2010 = vcvt.s32.f32 %v1946
  %v2011 = vcvt.s32.f32 %v1947
  %v2012 = vcvt.s32.f32 %v1948
  %v2013 = vcvt.s32.f32 %v1949
  %v2014 = vcvt.s32.f32 %v1950
  %v2015 = vcvt.s32.f32 %v1951
  %v2016 = vcvt.s32.f32 %v1952
  %v2017 = vcvt.s32.f32 %v1953
  %v2018 = vcvt.s32.f32 %v1954
  %v2019 = vcvt.s32.f32 %v1955
  %v2020 = vcvt.s32.f32 %v1956
  %v2021 = vcvt.s32.f32 %v1957
  %v2022 = vcvt.s32.f32 %v1958
  %v2023 = vcvt.s32.f32 %v1959
  %v2024 = vcvt.s32.f32 %v1960
  %v2025 = vcvt.s32.f32 %v1961
  %v2026 = vcvt.s32.f32 %v1962
  %v2027 = vcvt.s32.f32 %v1963
  %v2028 = vcvt.s32.f32 %v1964
  %v2029 = vcvt.s32.f32 %v1965
  %v2030 = vcvt.s32.f32 %v1966
  %v2031 = vcvt.s32.f32 %v1967
  %v2032 = vcvt.s32.f32 %v1968
  %v2033 = vcvt.s32.f32 %v1969
  %v2034 = vcvt.s32.f32 %v1970
  %v2035 = vcvt.s32.f32 %v1971
  %v2036 = vcvt.s32.f32 %v1972
  %v2037 = vcvt.s32.f32 %v1973
  %v2038 = vcvt.s32.f32 %v1974
  %v2039 = vcvt.s32.f32 %v1975
  %v2040 = vcvt.s32.f32 %v1976
  %v2041 = vcvt.s32.f32 %v1977
  %v2042 = vcvt.s32.f32 %v1978
  %v2043 = vcvt.s32.f32 %v1979
  %v2044 = vcvt.s32.f32 %v1980
  %v2045 = vcvt.s32.f32 %v1981
  %v2046 = vcvt.s32.f32 %v1982
  %v2047 = vcvt.s32.f32 %v1983
  %v2048 = vcvt.s32.f32 %v1984
  %v2049 = vcvt.s32.f32 %v1985
  %v2050 = vcvt.s32.f32 %v1986
  %v2051 = vcvt.s32.f32 %v1987
  %v2052 = vcvt.s32.f32 %v1988
  %v2053 = vcvt.s32.f32 %v1989
  %v2054 = vcvt.s32.f32 %v1990
  %v2055 = vcvt.s32.f32 %v1991
  %v2056 = vcvt.s32.f32 %v1992
  %v2057 = vcvt.s32.f32 %v1993
  %v2058 = vcvt.s32.f32 %v1994
  %v2059 = vcvt.s32.f32 %v1995
  %2060 = vmatprep.subr.mxu0 0.0
  %2061 = vmatpush1.msra.mxu0 %v1740
  %2062 = vmatprep.subr.mxu0 0.0
  %2063 = vmatpush1.msra.mxu0 %v1741
  %2064 = vmatprep.subr.mxu0 0.0
  %2065 = vmatpush1.msra.mxu0 %v1742
  %2066 = vmatprep.subr.mxu0 0.0
  %2067 = vmatpush1.msra.mxu0 %v1743
  %2068 = vmatprep.subr.mxu0 0.0
  %2069 = vmatpush1.msra.mxu0 %v1744
  %2070 = vmatprep.subr.mxu0 0.0
  %2071 = vmatpush1.msra.mxu0 %v1745
  %2072 = vmatprep.subr.mxu0 0.0
  %2073 = vmatpush1.msra.mxu0 %v1746
  %2074 = vmatprep.subr.mxu0 0.0
  %2075 = vmatpush1.msra.mxu0 %v1747
  %2076 = vmatprep.subr.mxu0 0.0
  %2077 = vmatpush1.msra.mxu0 %v1748
  %2078 = vmatprep.subr.mxu0 0.0
  %2079 = vmatpush1.msra.mxu0 %v1749
  %2080 = vmatprep.subr.mxu0 0.0
  %2081 = vmatpush1.msra.mxu0 %v1750
  %2082 = vmatprep.subr.mxu0 0.0
  %2083 = vmatpush1.msra.mxu0 %v1751
  %2084 = vmatprep.subr.mxu0 0.0
  %2085 = vmatpush1.msra.mxu0 %v1752
  %2086 = vmatprep.subr.mxu0 0.0
  %2087 = vmatpush1.msra.mxu0 %v1753
  %2088 = vmatprep.subr.mxu0 0.0
  %2089 = vmatpush1.msra.mxu0 %v1754
  %2090 = vmatprep.subr.mxu0 0.0
  %2091 = vmatpush1.msra.mxu0 %v1755
  %2092 = vmatprep.subr.mxu0 0.0
  %2093 = vmatpush1.msra.mxu0 %v1756
  %2094 = vmatprep.subr.mxu0 0.0
  %2095 = vmatpush1.msra.mxu0 %v1757
  %2096 = vmatprep.subr.mxu0 0.0
  %2097 = vmatpush1.msra.mxu0 %v1758
  %2098 = vmatprep.subr.mxu0 0.0
  %2099 = vmatpush1.msra.mxu0 %v1759
  %2100 = vmatprep.subr.mxu0 0.0
  %2101 = vmatpush1.msra.mxu0 %v1760
  %2102 = vmatprep.subr.mxu0 0.0
  %2103 = vmatpush1.msra.mxu0 %v1761
  %2104 = vmatprep.subr.mxu0 0.0
  %2105 = vmatpush1.msra.mxu0 %v1762
  %2106 = vmatprep.subr.mxu0 0.0
  %2107 = vmatpush1.msra.mxu0 %v1763
  %2108 = vmatprep.subr.mxu0 0.0
  %2109 = vmatpush1.msra.mxu0 %v1764
  %2110 = vmatprep.subr.mxu0 0.0
  %2111 = vmatpush1.msra.mxu0 %v1765
  %2112 = vmatprep.subr.mxu0 0.0
  %2113 = vmatpush1.msra.mxu0 %v1766
  %2114 = vmatprep.subr.mxu0 0.0
  %2115 = vmatpush1.msra.mxu0 %v1767
  %2116 = vmatprep.subr.mxu0 0.0
  %2117 = vmatpush1.msra.mxu0 %v1768
  %2118 = vmatprep.subr.mxu0 0.0
  %2119 = vmatpush1.msra.mxu0 %v1769
  %2120 = vmatprep.subr.mxu0 0.0
  %2121 = vmatpush1.msra.mxu0 %v1770
  %2122 = vmatprep.subr.mxu0 0.0
  %2123 = vmatpush1.msra.mxu0 %v1771
  %2124 = vmatprep.mubr.f32.mxu0 %v126
  %2125 = vmatmul.mubr.f32.gmra.mrb[0].mxu0 %v125
  %v2126 = vpop.f32.mrb[0].mxu0
  %v2127 = vadd.f32 0.0, %v2126
  %v2128 = vpop.f32.mrb[0].mxu0
  %2129 = vdwg.mxu0
  %2130 = vmatprep.subr.mxu0 0.0
  %2131 = vmatpush1.msra.mxu0 %v1772
  %2132 = vmatprep.subr.mxu0 0.0
  %2133 = vmatpush1.msra.mxu0 %v1773
  %2134 = vmatprep.subr.mxu0 0.0
  %2135 = vmatpush1.msra.mxu0 %v1774
  %2136 = vmatprep.subr.mxu0 0.0
  %2137 = vmatpush1.msra.mxu0 %v1775
  %2138 = vmatprep.subr.mxu0 0.0
  %2139 = vmatpush1.msra.mxu0 %v1776
  %2140 = vmatprep.subr.mxu0 0.0
  %2141 = vmatpush1.msra.mxu0 %v1777
  %2142 = vmatprep.subr.mxu0 0.0
  %2143 = vmatpush1.msra.mxu0 %v1778
  %2144 = vmatprep.subr.mxu0 0.0
  %2145 = vmatpush1.msra.mxu0 %v1779
  %2146 = vmatprep.subr.mxu0 0.0
  %2147 = vmatpush1.msra.mxu0 %v1780
  %2148 = vmatprep.subr.mxu0 0.0
  %2149 = vmatpush1.msra.mxu0 %v1781
  %2150 = vmatprep.subr.mxu0 0.0
  %2151 = vmatpush1.msra.mxu0 %v1782
  %2152 = vmatprep.subr.mxu0 0.0
  %2153 = vmatpush1.msra.mxu0 %v1783
  %2154 = vmatprep.subr.mxu0 0.0
  %2155 = vmatpush1.msra.mxu0 %v1784
  %2156 = vmatprep.subr.mxu0 0.0
  %2157 = vmatpush1.msra.mxu0 %v1785
  %2158 = vmatprep.subr.mxu0 0.0
  %2159 = vmatpush1.msra.mxu0 %v1786
  %2160 = vmatprep.subr.mxu0 0.0
  %2161 = vmatpush1.msra.mxu0 %v1787
  %2162 = vmatprep.subr.mxu0 0.0
  %2163 = vmatpush1.msra.mxu0 %v1788
  %2164 = vmatprep.subr.mxu0 0.0
  %2165 = vmatpush1.msra.mxu0 %v1789
  %2166 = vmatprep.subr.mxu0 0.0
  %2167 = vmatpush1.msra.mxu0 %v1790
  %2168 = vmatprep.subr.mxu0 0.0
  %2169 = vmatpush1.msra.mxu0 %v1791
  %2170 = vmatprep.subr.mxu0 0.0
  %2171 = vmatpush1.msra.mxu0 %v1792
  %2172 = vmatprep.subr.mxu0 0.0
  %2173 = vmatpush1.msra.mxu0 %v1793
  %2174 = vmatprep.subr.mxu0 0.0
  %2175 = vmatpush1.msra.mxu0 %v1794
  %2176 = vmatprep.subr.mxu0 0.0
  %2177 = vmatpush1.msra.mxu0 %v1795
  %2178 = vmatprep.subr.mxu0 0.0
  %2179 = vmatpush1.msra.mxu0 %v1796
  %2180 = vmatprep.subr.mxu0 0.0
  %2181 = vmatpush1.msra.mxu0 %v1797
  %2182 = vmatprep.subr.mxu0 0.0
  %2183 = vmatpush1.msra.mxu0 %v1798
  %2184 = vmatprep.subr.mxu0 0.0
  %2185 = vmatpush1.msra.mxu0 %v1799
  %2186 = vmatprep.subr.mxu0 0.0
  %2187 = vmatpush1.msra.mxu0 %v1800
  %2188 = vmatprep.subr.mxu0 0.0
  %2189 = vmatpush1.msra.mxu0 %v1801
  %2190 = vmatprep.subr.mxu0 0.0
  %2191 = vmatpush1.msra.mxu0 %v1802
  %2192 = vmatprep.subr.mxu0 0.0
  %2193 = vmatpush1.msra.mxu0 %v1803
  %2194 = vmatprep.mubr.f32.mxu0 %v128
  %2195 = vmatmul.mubr.f32.gmra.mrb[0].mxu0 %v127
  %v2196 = vpop.f32.mrb[0].mxu0
  %v2197 = vadd.f32 %v2127, %v2196
  %v2198 = vpop.f32.mrb[0].mxu0
  %2199 = vdwg.mxu0
  %2200 = vmatprep.subr.mxu0 0.0
  %2201 = vmatpush1.msra.mxu0 %v1868
  %2202 = vmatprep.subr.mxu0 0.0
  %2203 = vmatpush1.msra.mxu0 %v1869
  %2204 = vmatprep.subr.mxu0 0.0
  %2205 = vmatpush1.msra.mxu0 %v1870
  %2206 = vmatprep.subr.mxu0 0.0
  %2207 = vmatpush1.msra.mxu0 %v1871
  %2208 = vmatprep.subr.mxu0 0.0
  %2209 = vmatpush1.msra.mxu0 %v1872
  %2210 = vmatprep.subr.mxu0 0.0
  %2211 = vmatpush1.msra.mxu0 %v1873
  %2212 = vmatprep.subr.mxu0 0.0
  %2213 = vmatpush1.msra.mxu0 %v1874
  %2214 = vmatprep.subr.mxu0 0.0
  %2215 = vmatpush1.msra.mxu0 %v1875
  %2216 = vmatprep.subr.mxu0 0.0
  %2217 = vmatpush1.msra.mxu0 %v1876
  %2218 = vmatprep.subr.mxu0 0.0
  %2219 = vmatpush1.msra.mxu0 %v1877
  %2220 = vmatprep.subr.mxu0 0.0
  %2221 = vmatpush1.msra.mxu0 %v1878
  %2222 = vmatprep.subr.mxu0 0.0
  %2223 = vmatpush1.msra.mxu0 %v1879
  %2224 = vmatprep.subr.mxu0 0.0
  %2225 = vmatpush1.msra.mxu0 %v1880
  %2226 = vmatprep.subr.mxu0 0.0
  %2227 = vmatpush1.msra.mxu0 %v1881
  %2228 = vmatprep.subr.mxu0 0.0
  %2229 = vmatpush1.msra.mxu0 %v1882
  %2230 = vmatprep.subr.mxu0 0.0
  %2231 = vmatpush1.msra.mxu0 %v1883
  %2232 = vmatprep.subr.mxu0 0.0
  %2233 = vmatpush1.msra.mxu0 %v1884
  %2234 = vmatprep.subr.mxu0 0.0
  %2235 = vmatpush1.msra.mxu0 %v1885
  %2236 = vmatprep.subr.mxu0 0.0
  %2237 = vmatpush1.msra.mxu0 %v1886
  %2238 = vmatprep.subr.mxu0 0.0
  %2239 = vmatpush1.msra.mxu0 %v1887
  %2240 = vmatprep.subr.mxu0 0.0
  %2241 = vmatpush1.msra.mxu0 %v1888
  %2242 = vmatprep.subr.mxu0 0.0
  %2243 = vmatpush1.msra.mxu0 %v1889
  %2244 = vmatprep.subr.mxu0 0.0
  %2245 = vmatpush1.msra.mxu0 %v1890
  %2246 = vmatprep.subr.mxu0 0.0
  %2247 = vmatpush1.msra.mxu0 %v1891
  %2248 = vmatprep.subr.mxu0 0.0
  %2249 = vmatpush1.msra.mxu0 %v1892
  %2250 = vmatprep.subr.mxu0 0.0
  %2251 = vmatpush1.msra.mxu0 %v1893
  %2252 = vmatprep.subr.mxu0 0.0
  %2253 = vmatpush1.msra.mxu0 %v1894
  %2254 = vmatprep.subr.mxu0 0.0
  %2255 = vmatpush1.msra.mxu0 %v1895
  %2256 = vmatprep.subr.mxu0 0.0
  %2257 = vmatpush1.msra.mxu0 %v1896
  %2258 = vmatprep.subr.mxu0 0.0
  %2259 = vmatpush1.msra.mxu0 %v1897
  %2260 = vmatprep.subr.mxu0 0.0
  %2261 = vmatpush1.msra.mxu0 %v1898
  %2262 = vmatprep.subr.mxu0 0.0
  %2263 = vmatpush1.msra.mxu0 %v1899
  %2264 = vmatprep.mubr.f32.mxu0 %v126
  %2265 = vmatmul.mubr.f32.gmra.mrb[0].mxu0 %v125
  %v2266 = vpop.f32.mrb[0].mxu0
  %v2267 = vadd.f32 0.0, %v2266
  %v2268 = vpop.f32.mrb[0].mxu0
  %2269 = vdwg.mxu0
  %2270 = vmatprep.subr.mxu0 0.0
  %2271 = vmatpush1.msra.mxu0 %v1900
  %2272 = vmatprep.subr.mxu0 0.0
  %2273 = vmatpush1.msra.mxu0 %v1901
  %2274 = vmatprep.subr.mxu0 0.0
  %2275 = vmatpush1.msra.mxu0 %v1902
  %2276 = vmatprep.subr.mxu0 0.0
  %2277 = vmatpush1.msra.mxu0 %v1903
  %2278 = vmatprep.subr.mxu0 0.0
  %2279 = vmatpush1.msra.mxu0 %v1904
  %2280 = vmatprep.subr.mxu0 0.0
  %2281 = vmatpush1.msra.mxu0 %v1905
  %2282 = vmatprep.subr.mxu0 0.0
  %2283 = vmatpush1.msra.mxu0 %v1906
  %2284 = vmatprep.subr.mxu0 0.0
  %2285 = vmatpush1.msra.mxu0 %v1907
  %2286 = vmatprep.subr.mxu0 0.0
  %2287 = vmatpush1.msra.mxu0 %v1908
  %2288 = vmatprep.subr.mxu0 0.0
  %2289 = vmatpush1.msra.mxu0 %v1909
  %2290 = vmatprep.subr.mxu0 0.0
  %2291 = vmatpush1.msra.mxu0 %v1910
  %2292 = vmatprep.subr.mxu0 0.0
  %2293 = vmatpush1.msra.mxu0 %v1911
  %2294 = vmatprep.subr.mxu0 0.0
  %2295 = vmatpush1.msra.mxu0 %v1912
  %2296 = vmatprep.subr.mxu0 0.0
  %2297 = vmatpush1.msra.mxu0 %v1913
  %2298 = vmatprep.subr.mxu0 0.0
  %2299 = vmatpush1.msra.mxu0 %v1914
  %2300 = vmatprep.subr.mxu0 0.0
  %2301 = vmatpush1.msra.mxu0 %v1915
  %2302 = vmatprep.subr.mxu0 0.0
  %2303 = vmatpush1.msra.mxu0 %v1916
  %2304 = vmatprep.subr.mxu0 0.0
  %2305 = vmatpush1.msra.mxu0 %v1917
  %2306 = vmatprep.subr.mxu0 0.0
  %2307 = vmatpush1.msra.mxu0 %v1918
  %2308 = vmatprep.subr.mxu0 0.0
  %2309 = vmatpush1.msra.mxu0 %v1919
  %2310 = vmatprep.subr.mxu0 0.0
  %2311 = vmatpush1.msra.mxu0 %v1920
  %2312 = vmatprep.subr.mxu0 0.0
  %2313 = vmatpush1.msra.mxu0 %v1921
  %2314 = vmatprep.subr.mxu0 0.0
  %2315 = vmatpush1.msra.mxu0 %v1922
  %2316 = vmatprep.subr.mxu0 0.0
  %2317 = vmatpush1.msra.mxu0 %v1923
  %2318 = vmatprep.subr.mxu0 0.0
  %2319 = vmatpush1.msra.mxu0 %v1924
  %2320 = vmatprep.subr.mxu0 0.0
  %2321 = vmatpush1.msra.mxu0 %v1925
  %2322 = vmatprep.subr.mxu0 0.0
  %2323 = vmatpush1.msra.mxu0 %v1926
  %2324 = vmatprep.subr.mxu0 0.0
  %2325 = vmatpush1.msra.mxu0 %v1927
  %2326 = vmatprep.subr.mxu0 0.0
  %2327 = vmatpush1.msra.mxu0 %v1928
  %2328 = vmatprep.subr.mxu0 0.0
  %2329 = vmatpush1.msra.mxu0 %v1929
  %2330 = vmatprep.subr.mxu0 0.0
  %2331 = vmatpush1.msra.mxu0 %v1930
  %2332 = vmatprep.subr.mxu0 0.0
  %2333 = vmatpush1.msra.mxu0 %v1931
  %2334 = vmatprep.mubr.f32.mxu0 %v128
  %2335 = vmatmul.mubr.f32.gmra.mrb[0].mxu0 %v127
  %v2336 = vpop.f32.mrb[0].mxu0
  %v2337 = vadd.f32 %v2267, %v2336
  %v2338 = vpop.f32.mrb[0].mxu0
  %2339 = vdwg.mxu0
  %2340 = vmatprep.subr.mxu0 0.0
  %2341 = vmatpush1.msra.mxu0 %v1996
  %2342 = vmatprep.subr.mxu0 0.0
  %2343 = vmatpush1.msra.mxu0 %v1997
  %2344 = vmatprep.subr.mxu0 0.0
  %2345 = vmatpush1.msra.mxu0 %v1998
  %2346 = vmatprep.subr.mxu0 0.0
  %2347 = vmatpush1.msra.mxu0 %v1999
  %2348 = vmatprep.subr.mxu0 0.0
  %2349 = vmatpush1.msra.mxu0 %v2000
  %2350 = vmatprep.subr.mxu0 0.0
  %2351 = vmatpush1.msra.mxu0 %v2001
  %2352 = vmatprep.subr.mxu0 0.0
  %2353 = vmatpush1.msra.mxu0 %v2002
  %2354 = vmatprep.subr.mxu0 0.0
  %2355 = vmatpush1.msra.mxu0 %v2003
  %2356 = vmatprep.subr.mxu0 0.0
  %2357 = vmatpush1.msra.mxu0 %v2004
  %2358 = vmatprep.subr.mxu0 0.0
  %2359 = vmatpush1.msra.mxu0 %v2005
  %2360 = vmatprep.subr.mxu0 0.0
  %2361 = vmatpush1.msra.mxu0 %v2006
  %2362 = vmatprep.subr.mxu0 0.0
  %2363 = vmatpush1.msra.mxu0 %v2007
  %2364 = vmatprep.subr.mxu0 0.0
  %2365 = vmatpush1.msra.mxu0 %v2008
  %2366 = vmatprep.subr.mxu0 0.0
  %2367 = vmatpush1.msra.mxu0 %v2009
  %2368 = vmatprep.subr.mxu0 0.0
  %2369 = vmatpush1.msra.mxu0 %v2010
  %2370 = vmatprep.subr.mxu0 0.0
  %2371 = vmatpush1.msra.mxu0 %v2011
  %2372 = vmatprep.subr.mxu0 0.0
  %2373 = vmatpush1.msra.mxu0 %v2012
  %2374 = vmatprep.subr.mxu0 0.0
  %2375 = vmatpush1.msra.mxu0 %v2013
  %2376 = vmatprep.subr.mxu0 0.0
  %2377 = vmatpush1.msra.mxu0 %v2014
  %2378 = vmatprep.subr.mxu0 0.0
  %2379 = vmatpush1.msra.mxu0 %v2015
  %2380 = vmatprep.subr.mxu0 0.0
  %2381 = vmatpush1.msra.mxu0 %v2016
  %2382 = vmatprep.subr.mxu0 0.0
  %2383 = vmatpush1.msra.mxu0 %v2017
  %2384 = vmatprep.subr.mxu0 0.0
  %2385 = vmatpush1.msra.mxu0 %v2018
  %2386 = vmatprep.subr.mxu0 0.0
  %2387 = vmatpush1.msra.mxu0 %v2019
  %2388 = vmatprep.subr.mxu0 0.0
  %2389 = vmatpush1.msra.mxu0 %v2020
  %2390 = vmatprep.subr.mxu0 0.0
  %2391 = vmatpush1.msra.mxu0 %v2021
  %2392 = vmatprep.subr.mxu0 0.0
  %2393 = vmatpush1.msra.mxu0 %v2022
  %2394 = vmatprep.subr.mxu0 0.0
  %2395 = vmatpush1.msra.mxu0 %v2023
  %2396 = vmatprep.subr.mxu0 0.0
  %2397 = vmatpush1.msra.mxu0 %v2024
  %2398 = vmatprep.subr.mxu0 0.0
  %2399 = vmatpush1.msra.mxu0 %v2025
  %2400 = vmatprep.subr.mxu0 0.0
  %2401 = vmatpush1.msra.mxu0 %v2026
  %2402 = vmatprep.subr.mxu0 0.0
  %2403 = vmatpush1.msra.mxu0 %v2027
  %2404 = vmatprep.mubr.f32.mxu0 %v126
  %2405 = vmatmul.mubr.f32.gmra.mrb[0].mxu0 %v125
  %v2406 = vpop.f32.mrb[0].mxu0
  %v2407 = vadd.f32 0.0, %v2406
  %v2408 = vpop.f32.mrb[0].mxu0
  %2409 = vdwg.mxu0
  %2410 = vmatprep.subr.mxu0 0.0
  %2411 = vmatpush1.msra.mxu0 %v2028
  %2412 = vmatprep.subr.mxu0 0.0
  %2413 = vmatpush1.msra.mxu0 %v2029
  %2414 = vmatprep.subr.mxu0 0.0
  %2415 = vmatpush1.msra.mxu0 %v2030
  %2416 = vmatprep.subr.mxu0 0.0
  %2417 = vmatpush1.msra.mxu0 %v2031
  %2418 = vmatprep.subr.mxu0 0.0
  %2419 = vmatpush1.msra.mxu0 %v2032
  %2420 = vmatprep.subr.mxu0 0.0
  %2421 = vmatpush1.msra.mxu0 %v2033
  %2422 = vmatprep.subr.mxu0 0.0
  %2423 = vmatpush1.msra.mxu0 %v2034
  %2424 = vmatprep.subr.mxu0 0.0
  %2425 = vmatpush1.msra.mxu0 %v2035
  %2426 = vmatprep.subr.mxu0 0.0
  %2427 = vmatpush1.msra.mxu0 %v2036
  %2428 = vmatprep.subr.mxu0 0.0
  %2429 = vmatpush1.msra.mxu0 %v2037
  %2430 = vmatprep.subr.mxu0 0.0
  %2431 = vmatpush1.msra.mxu0 %v2038
  %2432 = vmatprep.subr.mxu0 0.0
  %2433 = vmatpush1.msra.mxu0 %v2039
  %2434 = vmatprep.subr.mxu0 0.0
  %2435 = vmatpush1.msra.mxu0 %v2040
  %2436 = vmatprep.subr.mxu0 0.0
  %2437 = vmatpush1.msra.mxu0 %v2041
  %2438 = vmatprep.subr.mxu0 0.0
  %2439 = vmatpush1.msra.mxu0 %v2042
  %2440 = vmatprep.subr.mxu0 0.0
  %2441 = vmatpush1.msra.mxu0 %v2043
  %2442 = vmatprep.subr.mxu0 0.0
  %2443 = vmatpush1.msra.mxu0 %v2044
  %2444 = vmatprep.subr.mxu0 0.0
  %2445 = vmatpush1.msra.mxu0 %v2045
  %2446 = vmatprep.subr.mxu0 0.0
  %2447 = vmatpush1.msra.mxu0 %v2046
  %2448 = vmatprep.subr.mxu0 0.0
  %2449 = vmatpush1.msra.mxu0 %v2047
  %2450 = vmatprep.subr.mxu0 0.0
  %2451 = vmatpush1.msra.mxu0 %v2048
  %2452 = vmatprep.subr.mxu0 0.0
  %2453 = vmatpush1.msra.mxu0 %v2049
  %2454 = vmatprep.subr.mxu0 0.0
  %2455 = vmatpush1.msra.mxu0 %v2050
  %2456 = vmatprep.subr.mxu0 0.0
  %2457 = vmatpush1.msra.mxu0 %v2051
  %2458 = vmatprep.subr.mxu0 0.0
  %2459 = vmatpush1.msra.mxu0 %v2052
  %2460 = vmatprep.subr.mxu0 0.0
  %2461 = vmatpush1.msra.mxu0 %v2053
  %2462 = vmatprep.subr.mxu0 0.0
  %2463 = vmatpush1.msra.mxu0 %v2054
  %2464 = vmatprep.subr.mxu0 0.0
  %2465 = vmatpush1.msra.mxu0 %v2055
  %2466 = vmatprep.subr.mxu0 0.0
  %2467 = vmatpush1.msra.mxu0 %v2056
  %2468 = vmatprep.subr.mxu0 0.0
  %2469 = vmatpush1.msra.mxu0 %v2057
  %2470 = vmatprep.subr.mxu0 0.0
  %2471 = vmatpush1.msra.mxu0 %v2058
  %2472 = vmatprep.subr.mxu0 0.0
  %2473 = vmatpush1.msra.mxu0 %v2059
  %2474 = vmatprep.mubr.f32.mxu0 %v128
  %2475 = vmatmul.mubr.f32.gmra.mrb[0].mxu0 %v127
  %v2476 = vpop.f32.mrb[0].mxu0
  %v2477 = vadd.f32 %v2407, %v2476
  %v2478 = vpop.f32.mrb[0].mxu0
  %2479 = vdwg.mxu0
  %v2480 = vld [vmem:[%s3] sm:$0x1]
  %v2481 = vadd.f32 %v2480, %v2197
  %2482 = vst [vmem:[%s3] sm:$0x1] %v2481
  %v2483 = vld [vmem:[%s3 + $0x1] sm:$0x1]
  %v2484 = vadd.f32 %v2483, %v2337
  %2485 = vst [vmem:[%s3 + $0x1] sm:$0x1] %v2484
  %v2486 = vld [vmem:[%s3 + $0x2] sm:$0x1]
  %v2488 = vrot.slane %v2477, 1
  %v2490 = vadd.f32 %v2486, %v2488
  %2491 = vst [vmem:[%s3 + $0x2] sm:$0x1] %v2490
  // Predicated region
  $region18: #{_forward_device.1} parent=0 // pred_check
    _
  $region19: #{_forward_device.1} parent=0 // pred_check_branch
    %2493 = sbr.rel (0) target = $region21
  $region20: #{_forward_device.1} parent=0 // pred_region
    _
  $region21: #{_forward_device.1} parent=0 // pred_fallthru
    _
  // Predicated region
  $region22: #{_forward_device.1} parent=0 // pred_check
    _
  $region23: #{_forward_device.1} parent=0 // pred_check_branch
    %2495 = sbr.rel (0) target = $region25
  $region24: #{_forward_device.1} parent=0 // pred_region
    _
  $region25: #{_forward_device.1} parent=0 // pred_fallthru
    _

</llo_original>
